<compile_context>
chip_gen: v5e
topology: v5e:2x2
jax: 0.10.0
libtpu: 0.0.40
codegen_flags: <defaults>
</compile_context>

<pallas_src>
import numpy as np

import jax
import jax.numpy as jnp
from jax.experimental import pallas as pl
from jax.experimental.pallas import tpu as pltpu

LEAKY_SLOPE = 0.01   # nn.LeakyReLU default
BN_EPS = 1e-5        # nn.BatchNorm2d default

INPUT_SHAPE = (3, 16, 16)          # (C, H, W)
LATENT_DIM = 32
HIDDEN_DIMS = [8, 16, 32]          # as passed to __init__ (then reversed)
CONV_IN = (HIDDEN_DIMS[-1], 2, 2)  # [hidden_dims[-1], 2, 2]
BATCH = 2


# ----------------------- host-side weight packing --------------------------


def _fc2_col_perm():
    """Permutation so fc2 output lanes are ordered (h, w, c) instead of the
    PyTorch .view(-1, C, H, W) ordering (c, h, w)."""
    c0, h0, w0 = CONV_IN
    perm = np.zeros((c0 * h0 * w0,), np.int64)
    for h in range(h0):
        for w in range(w0):
            for c in range(c0):
                perm[h * (w0 * c0) + w * c0 + c] = c * (h0 * w0) + h * w0 + w
    return perm


def _pack_convT_rowops(wt, bias, gamma, beta, mean, var, w_in):
    """ConvTranspose2d(k=3,s=2,p=1,op=1) + eval BatchNorm folded into three
    row-operator matrices A_ky (W_in*Cin, 2*W_in*Cout) and a bias row.

    Output row 2m   = X[m]   @ A_1
    Output row 2m+1 = X[m]   @ A_2 + X[m+1] @ A_0     (X[H] := 0)
    Lane order of inputs/outputs is (spatial_w, channel).
    """
    cin, cout = wt.shape[0], wt.shape[1]
    s = gamma / np.sqrt(var + BN_EPS)
    bias_eff = s * bias + (beta - s * mean)
    ws = (wt * s[None, :, None, None]).astype(np.float32)
    ow = 2 * w_in
    a = np.zeros((3, w_in * cin, ow * cout), np.float32)
    for ky in range(3):
        for ix in range(w_in):
            for ox in range(ow):
                kx = ox + 1 - 2 * ix          # oy = 2*iy - 1 + ky ; same in x
                if 0 <= kx <= 2:
                    a[ky, ix * cin:(ix + 1) * cin,
                      ox * cout:(ox + 1) * cout] = ws[:, :, ky, kx]
    brow = np.tile(bias_eff, ow).astype(np.float32).reshape(1, ow * cout)
    return a, brow


def _pack_final_conv(w, bias, w_in):
    """Conv2d(k=3,s=1,p=1) as three row-operators C_ky (W*Cin, Cout*W).
    Output lanes ordered (channel, spatial_w) so the NCHW store is contiguous.
    """
    cout, cin = w.shape[0], w.shape[1]
    c = np.zeros((3, w_in * cin, cout * w_in), np.float32)
    for ky in range(3):
        for ix in range(w_in):
            for ox in range(w_in):
                kx = ix - ox + 1              # ix = ox + kx - 1
                if 0 <= kx <= 2:
                    for d in range(cout):
                        c[ky, ix * cin:(ix + 1) * cin,
                          d * w_in + ox] = w[d, :, ky, kx]
    brow = np.repeat(bias, w_in).astype(np.float32).reshape(1, cout * w_in)
    return c, brow


# ------------------------------ parameters ----------------------------------


def init_params(key):
    hid = list(reversed(HIDDEN_DIMS))  # [32, 16, 8] — self.hidden_dims.reverse()
    keys = iter(jax.random.split(key, 32))

    def uniform(shape, fan_in):
        bound = 1.0 / np.sqrt(fan_in)
        return np.asarray(jax.random.uniform(next(keys), shape, jnp.float32,
                                             -bound, bound))

    d_half = LATENT_DIM // 2
    d_out = int(np.prod(CONV_IN))

    raw = {
        "fc1_w": uniform((d_half, LATENT_DIM), LATENT_DIM),  # PyTorch (out, in)
        "fc1_b": uniform((d_half,), LATENT_DIM),
        "fc2_w": uniform((d_out, d_half), d_half),
        "fc2_b": uniform((d_out,), d_half),
        "ct": [],
    }

    ct_specs = [(hid[0], hid[1]), (hid[1], hid[2]), (hid[2], hid[2])]
    w_in = CONV_IN[2]
    for cin, cout in ct_specs:
        raw["ct"].append(dict(
            wt=uniform((cin, cout, 3, 3), cin * 9),
            b=uniform((cout,), cin * 9),
            gamma=np.asarray(1.0 + 0.1 * jax.random.normal(next(keys), (cout,),
                                                           jnp.float32)),
            beta=np.asarray(0.1 * jax.random.normal(next(keys), (cout,),
                                                    jnp.float32)),
            mean=np.asarray(0.1 * jax.random.normal(next(keys), (cout,),
                                                    jnp.float32)),
            var=np.asarray(1.0 + 0.1 * jax.random.uniform(next(keys), (cout,),
                                                          jnp.float32)),
            w_in=w_in,
        ))
        w_in *= 2
    raw["conv_w"] = uniform((INPUT_SHAPE[0], hid[2], 3, 3), hid[2] * 9)
    raw["conv_b"] = uniform((INPUT_SHAPE[0],), hid[2] * 9)
    raw["conv_w_in"] = w_in  # 16

    # ---- pack into the fused-kernel format --------------------------------
    perm = _fc2_col_perm()
    params = {
        "fc1_w": jnp.asarray(raw["fc1_w"].T),
        "fc1_b": jnp.asarray(raw["fc1_b"].reshape(1, -1)),
        "fc2_w": jnp.asarray(raw["fc2_w"].T[:, perm]),
        "fc2_b": jnp.asarray(raw["fc2_b"][perm].reshape(1, -1)),
        "ct": [],
    }
    for blk in raw["ct"]:
        a, brow = _pack_convT_rowops(blk["wt"], blk["b"], blk["gamma"],
                                     blk["beta"], blk["mean"], blk["var"],
                                     blk["w_in"])
        params["ct"].append({"a": jnp.asarray(a), "b": jnp.asarray(brow)})
    cf, bf = _pack_final_conv(raw["conv_w"], raw["conv_b"], raw["conv_w_in"])
    params["conv_a"] = jnp.asarray(cf)
    params["conv_b"] = jnp.asarray(bf)
    return params, raw


# ----------------------------- fused Pallas kernel --------------------------


def _decoder_kernel(z_ref, w1_ref, b1_ref, w2_ref, b2_ref,
                    a1_ref, c1_ref, a2_ref, c2_ref, a3_ref, c3_ref,
                    cf_ref, bf_ref, out_ref):
    f32 = jnp.float32

    def leaky(v):
        return jnp.where(v >= 0, v, LEAKY_SLOPE * v)

    def mm(a, b):
        return jnp.dot(a, b, preferred_element_type=f32)

    # ---------------- decoder_input: Linear + LeakyReLU + Linear -----------
    z = z_ref[0]                                              # (1, latent)
    h = leaky(mm(z, w1_ref[...]) + b1_ref[...])               # (1, latent//2)
    h = mm(h, w2_ref[...]) + b2_ref[...]                      # (1, H0*W0*C0)

    # fc2 columns were pre-permuted to (h, w, c) order, so the two image rows
    # of the 2x2 seed are two contiguous lane slices.
    c0, h0, w0 = CONV_IN
    row_w = w0 * c0
    x = jnp.concatenate(
        [h[:, i * row_w:(i + 1) * row_w] for i in range(h0)], axis=0)

    # ------------- ConvTranspose2d (+BN+LeakyReLU) as row-phase matmuls ----
    def conv_transpose(x, a_ref, bias_ref):
        hh, n_in = x.shape
        bias = bias_ref[...]
        # x[m + 1], with a zero row appended at the bottom of the image.
        x_dn = jnp.concatenate([x[1:hh, :], jnp.zeros((1, n_in), f32)], axis=0)
        y_even = leaky(mm(x, a_ref[1]) + bias)                      # rows 2m
        y_odd = leaky(mm(x, a_ref[2]) + mm(x_dn, a_ref[0]) + bias)  # rows 2m+1
        rows = []
        for m in range(hh):
            rows.append(y_even[m:m + 1, :])
            rows.append(y_odd[m:m + 1, :])
        return jnp.concatenate(rows, axis=0)                  # (2H, 2W*Cout)

    x = conv_transpose(x, a1_ref, c1_ref)                     # (4,  4*16)
    x = conv_transpose(x, a2_ref, c2_ref)                     # (8,  8*8)
    x = conv_transpose(x, a3_ref, c3_ref)                     # (16, 16*8)

    # ------------- final Conv2d(k=3, s=1, p=1) + Tanh ----------------------
    hh, n_in = x.shape
    zrow = jnp.zeros((1, n_in), f32)
    x_up = jnp.concatenate([zrow, x[0:hh - 1, :]], axis=0)    # row oh-1
    x_dn = jnp.concatenate([x[1:hh, :], zrow], axis=0)        # row oh+1
    y = jnp.tanh(mm(x_up, cf_ref[0]) + mm(x, cf_ref[1]) + mm(x_dn, cf_ref[2])
                 + bf_ref[...])                               # (16, 3*16)

    # ------------- NCHW output block (1, C, H, W) --------------------------
    w_out = INPUT_SHAPE[2]
    for d in range(INPUT_SHAPE[0]):
        out_ref[0, d, :, :] = y[:, d * w_out:(d + 1) * w_out]


def _full_spec(arr):
    nd = arr.ndim
    return pl.BlockSpec(arr.shape, lambda b, _nd=nd: (0,) * _nd)


def decoder_forward(z, params):
    bn = z.shape[0]
    z3 = z.reshape(bn, 1, LATENT_DIM)
    operands = [z3, params["fc1_w"], params["fc1_b"],
                params["fc2_w"], params["fc2_b"]]
    for blk in params["ct"]:
        operands += [blk["a"], blk["b"]]
    operands += [params["conv_a"], params["conv_b"]]

    in_specs = [pl.BlockSpec((1, 1, LATENT_DIM), lambda b: (b, 0, 0))]
    in_specs += [_full_spec(a) for a in operands[1:]]

    out = pl.pallas_call(
        _decoder_kernel,
        grid=(bn,),
        out_shape=jax.ShapeDtypeStruct((bn,) + INPUT_SHAPE, jnp.float32),
        in_specs=in_specs,
        out_specs=pl.BlockSpec((1,) + INPUT_SHAPE, lambda b: (b, 0, 0, 0)),
        compiler_params=pltpu.CompilerParams(
            dimension_semantics=("parallel",)),
    )(*operands)
    # torchvision T.Resize((16, 16), antialias=True) on an already-16x16 image
    # is the identity, so it is intentionally omitted.
    return out


# ------------------------- numpy reference (for checking) -------------------


def _ref_conv_transpose(x, wt, bias):
    bn, cin, hh, ww = x.shape
    cout = wt.shape[1]
    oh, ow = 2 * hh, 2 * ww
    y = np.zeros((bn, cout, oh, ow), np.float32)
    for iy in range(hh):
        for ix in range(ww):
            v = x[:, :, iy, ix]
            for ky in range(3):
                for kx in range(3):
                    oy, ox = 2 * iy - 1 + ky, 2 * ix - 1 + kx
                    if 0 <= oy < oh and 0 <= ox < ow:
                        y[:, :, oy, ox] += v @ wt[:, :, ky, kx]
    return y + bias[None, :, None, None]


def _ref_conv2d(x, w, bias):
    bn, cin, hh, ww = x.shape
    cout = w.shape[0]
    y = np.zeros((bn, cout, hh, ww), np.float32)
    for oy in range(hh):
        for ox in range(ww):
            for ky in range(3):
                for kx in range(3):
                    iy, ix = oy + ky - 1, ox + kx - 1
                    if 0 <= iy < hh and 0 <= ix < ww:
                        y[:, :, oy, ox] += x[:, :, iy, ix] @ w[:, :, ky, kx].T
    return y + bias[None, :, None, None]


def _reference_forward(z, raw):
    x = z @ raw["fc1_w"].T + raw["fc1_b"]
    x = np.where(x >= 0, x, LEAKY_SLOPE * x)
    x = x @ raw["fc2_w"].T + raw["fc2_b"]
    bn = z.shape[0]
    x = x.reshape(bn, CONV_IN[0], CONV_IN[1], CONV_IN[2])
    for blk in raw["ct"]:
        x = _ref_conv_transpose(x, blk["wt"], blk["b"])
        s = blk["gamma"] / np.sqrt(blk["var"] + BN_EPS)
        x = (s[None, :, None, None] * (x - blk["mean"][None, :, None, None])
             + blk["beta"][None, :, None, None])
        x = np.where(x >= 0, x, LEAKY_SLOPE * x)
    x = _ref_conv2d(x, raw["conv_w"], raw["conv_b"])
    return np.tanh(x)   # resize(16,16) of a 16x16 image is the identity


# --------------------------------- main --------------------------------------

if __name__ == "__main__":
    key = jax.random.PRNGKey(0)
    pkey, zkey = jax.random.split(key)
    params, raw = init_params(pkey)
    z = jax.random.normal(zkey, (BATCH, LATENT_DIM), jnp.float32)

    out = jax.jit(decoder_forward)(z, params)
    out = jax.block_until_ready(out)

    assert out.shape == (BATCH,) + INPUT_SHAPE, out.shape
    out_np = np.asarray(out)
    assert np.all(np.isfinite(out_np))
    assert np.all(np.abs(out_np) <= 1.0 + 1e-5)  # tanh output range

    ref = _reference_forward(np.asarray(z), raw)
    max_err = float(np.max(np.abs(out_np - ref)))
    assert max_err < 1e-2, f"max abs error vs reference: {max_err}"

    print("KERNEL_OK")
</pallas_src>

<mosaic_0001>
module attributes {stable_mosaic.version = 11 : i64} {
  func.func @_decoder_kernel(%arg0: i32, %arg1: memref<1x1x32xf32, #tpu.memory_space<vmem>>, %arg2: memref<32x16xf32, #tpu.memory_space<vmem>>, %arg3: memref<1x16xf32, #tpu.memory_space<vmem>>, %arg4: memref<16x128xf32, #tpu.memory_space<vmem>>, %arg5: memref<1x128xf32, #tpu.memory_space<vmem>>, %arg6: memref<3x64x64xf32, #tpu.memory_space<vmem>>, %arg7: memref<1x64xf32, #tpu.memory_space<vmem>>, %arg8: memref<3x64x64xf32, #tpu.memory_space<vmem>>, %arg9: memref<1x64xf32, #tpu.memory_space<vmem>>, %arg10: memref<3x64x128xf32, #tpu.memory_space<vmem>>, %arg11: memref<1x128xf32, #tpu.memory_space<vmem>>, %arg12: memref<3x128x48xf32, #tpu.memory_space<vmem>>, %arg13: memref<1x48xf32, #tpu.memory_space<vmem>>, %arg14: memref<1x3x16x16xf32, #tpu.memory_space<vmem>>) attributes {dimension_semantics = [#tpu.dimension_semantics<parallel>], iteration_bounds = array<i64: 2>, scalar_prefetch = 0 : i64, scratch_operands = 0 : i64, tpu.core_type = #tpu.core_type<tc>, window_params = [{transform_indices = @transform_0, window_bounds = array<i64: 1, 1, 32>}, {pipeline_mode = #tpu.pipeline_mode<synchronous>, transform_indices = @transform_1, window_bounds = array<i64: 32, 16>}, {pipeline_mode = #tpu.pipeline_mode<synchronous>, transform_indices = @transform_2, window_bounds = array<i64: 1, 16>}, {pipeline_mode = #tpu.pipeline_mode<synchronous>, transform_indices = @transform_3, window_bounds = array<i64: 16, 128>}, {pipeline_mode = #tpu.pipeline_mode<synchronous>, transform_indices = @transform_4, window_bounds = array<i64: 1, 128>}, {pipeline_mode = #tpu.pipeline_mode<synchronous>, transform_indices = @transform_5, window_bounds = array<i64: 3, 64, 64>}, {pipeline_mode = #tpu.pipeline_mode<synchronous>, transform_indices = @transform_6, window_bounds = array<i64: 1, 64>}, {pipeline_mode = #tpu.pipeline_mode<synchronous>, transform_indices = @transform_7, window_bounds = array<i64: 3, 64, 64>}, {pipeline_mode = #tpu.pipeline_mode<synchronous>, transform_indices = @transform_8, window_bounds = array<i64: 1, 64>}, {pipeline_mode = #tpu.pipeline_mode<synchronous>, transform_indices = @transform_9, window_bounds = array<i64: 3, 64, 128>}, {pipeline_mode = #tpu.pipeline_mode<synchronous>, transform_indices = @transform_10, window_bounds = array<i64: 1, 128>}, {pipeline_mode = #tpu.pipeline_mode<synchronous>, transform_indices = @transform_11, window_bounds = array<i64: 3, 128, 48>}, {pipeline_mode = #tpu.pipeline_mode<synchronous>, transform_indices = @transform_12, window_bounds = array<i64: 1, 48>}, {transform_indices = @transform_13, window_bounds = array<i64: 1, 3, 16, 16>}]} {
    %c0 = arith.constant 0 : index
    %c0_0 = arith.constant 0 : index
    %c0_1 = arith.constant 0 : index
    %0 = vector.load %arg1[%c0, %c0_0, %c0_1] : memref<1x1x32xf32, #tpu.memory_space<vmem>>, vector<1x1x32xf32>
    %1 = vector.shape_cast %0 : vector<1x1x32xf32> to vector<1x32xf32>
    %c0_2 = arith.constant 0 : index
    %c0_3 = arith.constant 0 : index
    %2 = vector.load %arg2[%c0_2, %c0_3] : memref<32x16xf32, #tpu.memory_space<vmem>>, vector<32x16xf32>
    %cst = arith.constant dense<0.000000e+00> : vector<1x16xf32>
    %3 = tpu.matmul %1, %2, %cst {dimension_numbers = #tpu.dot_dimension_numbers<[1], [0], [0], [1], [0, 0, 1, 1], [], []>} : vector<1x32xf32>, vector<32x16xf32>, vector<1x16xf32> -> vector<1x16xf32>
    %c0_4 = arith.constant 0 : index
    %c0_5 = arith.constant 0 : index
    %4 = vector.load %arg3[%c0_4, %c0_5] : memref<1x16xf32, #tpu.memory_space<vmem>>, vector<1x16xf32>
    %5 = arith.addf %3, %4 : vector<1x16xf32>
    %cst_6 = arith.constant 0.000000e+00 : f32
    %6 = vector.broadcast %cst_6 : f32 to vector<1x16xf32>
    %7 = arith.cmpf oge, %5, %6 : vector<1x16xf32>
    %cst_7 = arith.constant 0.00999999977 : f32
    %8 = vector.broadcast %cst_7 : f32 to vector<1x16xf32>
    %9 = arith.mulf %8, %5 : vector<1x16xf32>
    %10 = arith.select %7, %5, %9 : vector<1x16xi1>, vector<1x16xf32>
    %c0_8 = arith.constant 0 : index
    %c0_9 = arith.constant 0 : index
    %11 = vector.load %arg4[%c0_8, %c0_9] : memref<16x128xf32, #tpu.memory_space<vmem>>, vector<16x128xf32>
    %cst_10 = arith.constant dense<0.000000e+00> : vector<1x128xf32>
    %12 = tpu.matmul %10, %11, %cst_10 {dimension_numbers = #tpu.dot_dimension_numbers<[1], [0], [0], [1], [0, 0, 1, 1], [], []>} : vector<1x16xf32>, vector<16x128xf32>, vector<1x128xf32> -> vector<1x128xf32>
    %c0_11 = arith.constant 0 : index
    %c0_12 = arith.constant 0 : index
    %13 = vector.load %arg5[%c0_11, %c0_12] : memref<1x128xf32, #tpu.memory_space<vmem>>, vector<1x128xf32>
    %14 = arith.addf %12, %13 : vector<1x128xf32>
    %15 = vector.extract_strided_slice %14 {offsets = [0, 0], sizes = [1, 64], strides = [1, 1]} : vector<1x128xf32> to vector<1x64xf32>
    %16 = vector.extract_strided_slice %14 {offsets = [0, 64], sizes = [1, 64], strides = [1, 1]} : vector<1x128xf32> to vector<1x64xf32>
    %17 = tpu.concatenate %15, %16 in 0 : vector<1x64xf32>, vector<1x64xf32> -> vector<2x64xf32>
    %c0_13 = arith.constant 0 : index
    %c0_14 = arith.constant 0 : index
    %18 = vector.load %arg7[%c0_13, %c0_14] : memref<1x64xf32, #tpu.memory_space<vmem>>, vector<1x64xf32>
    %19 = vector.extract_strided_slice %17 {offsets = [1, 0], sizes = [1, 64], strides = [1, 1]} : vector<2x64xf32> to vector<1x64xf32>
    %cst_15 = arith.constant 0.000000e+00 : f32
    %20 = vector.broadcast %cst_15 : f32 to vector<1x64xf32>
    %21 = tpu.concatenate %19, %20 in 0 : vector<1x64xf32>, vector<1x64xf32> -> vector<2x64xf32>
    %c1 = arith.constant 1 : index
    %c0_16 = arith.constant 0 : index
    %c0_17 = arith.constant 0 : index
    %22 = vector.load %arg6[%c1, %c0_16, %c0_17] : memref<3x64x64xf32, #tpu.memory_space<vmem>>, vector<1x64x64xf32>
    %23 = vector.shape_cast %22 : vector<1x64x64xf32> to vector<64x64xf32>
    %cst_18 = arith.constant dense<0.000000e+00> : vector<2x64xf32>
    %24 = tpu.matmul %17, %23, %cst_18 {dimension_numbers = #tpu.dot_dimension_numbers<[1], [0], [0], [1], [0, 0, 1, 1], [], []>} : vector<2x64xf32>, vector<64x64xf32>, vector<2x64xf32> -> vector<2x64xf32>
    %25 = vector.broadcast %18 : vector<1x64xf32> to vector<2x64xf32>
    %26 = arith.addf %24, %25 : vector<2x64xf32>
    %cst_19 = arith.constant 0.000000e+00 : f32
    %27 = vector.broadcast %cst_19 : f32 to vector<2x64xf32>
    %28 = arith.cmpf oge, %26, %27 : vector<2x64xf32>
    %cst_20 = arith.constant 0.00999999977 : f32
    %29 = vector.broadcast %cst_20 : f32 to vector<2x64xf32>
    %30 = arith.mulf %29, %26 : vector<2x64xf32>
    %31 = arith.select %28, %26, %30 : vector<2x64xi1>, vector<2x64xf32>
    %c2 = arith.constant 2 : index
    %c0_21 = arith.constant 0 : index
    %c0_22 = arith.constant 0 : index
    %32 = vector.load %arg6[%c2, %c0_21, %c0_22] : memref<3x64x64xf32, #tpu.memory_space<vmem>>, vector<1x64x64xf32>
    %33 = vector.shape_cast %32 : vector<1x64x64xf32> to vector<64x64xf32>
    %cst_23 = arith.constant dense<0.000000e+00> : vector<2x64xf32>
    %34 = tpu.matmul %17, %33, %cst_23 {dimension_numbers = #tpu.dot_dimension_numbers<[1], [0], [0], [1], [0, 0, 1, 1], [], []>} : vector<2x64xf32>, vector<64x64xf32>, vector<2x64xf32> -> vector<2x64xf32>
    %c0_24 = arith.constant 0 : index
    %c0_25 = arith.constant 0 : index
    %c0_26 = arith.constant 0 : index
    %35 = vector.load %arg6[%c0_24, %c0_25, %c0_26] : memref<3x64x64xf32, #tpu.memory_space<vmem>>, vector<1x64x64xf32>
    %36 = vector.shape_cast %35 : vector<1x64x64xf32> to vector<64x64xf32>
    %cst_27 = arith.constant dense<0.000000e+00> : vector<2x64xf32>
    %37 = tpu.matmul %21, %36, %cst_27 {dimension_numbers = #tpu.dot_dimension_numbers<[1], [0], [0], [1], [0, 0, 1, 1], [], []>} : vector<2x64xf32>, vector<64x64xf32>, vector<2x64xf32> -> vector<2x64xf32>
    %38 = arith.addf %34, %37 : vector<2x64xf32>
    %39 = vector.broadcast %18 : vector<1x64xf32> to vector<2x64xf32>
    %40 = arith.addf %38, %39 : vector<2x64xf32>
    %cst_28 = arith.constant 0.000000e+00 : f32
    %41 = vector.broadcast %cst_28 : f32 to vector<2x64xf32>
    %42 = arith.cmpf oge, %40, %41 : vector<2x64xf32>
    %cst_29 = arith.constant 0.00999999977 : f32
    %43 = vector.broadcast %cst_29 : f32 to vector<2x64xf32>
    %44 = arith.mulf %43, %40 : vector<2x64xf32>
    %45 = arith.select %42, %40, %44 : vector<2x64xi1>, vector<2x64xf32>
    %46 = vector.extract_strided_slice %31 {offsets = [0, 0], sizes = [1, 64], strides = [1, 1]} : vector<2x64xf32> to vector<1x64xf32>
    %47 = vector.extract_strided_slice %45 {offsets = [0, 0], sizes = [1, 64], strides = [1, 1]} : vector<2x64xf32> to vector<1x64xf32>
    %48 = vector.extract_strided_slice %31 {offsets = [1, 0], sizes = [1, 64], strides = [1, 1]} : vector<2x64xf32> to vector<1x64xf32>
    %49 = vector.extract_strided_slice %45 {offsets = [1, 0], sizes = [1, 64], strides = [1, 1]} : vector<2x64xf32> to vector<1x64xf32>
    %50 = tpu.concatenate %46, %47, %48, %49 in 0 : vector<1x64xf32>, vector<1x64xf32>, vector<1x64xf32>, vector<1x64xf32> -> vector<4x64xf32>
    %c0_30 = arith.constant 0 : index
    %c0_31 = arith.constant 0 : index
    %51 = vector.load %arg9[%c0_30, %c0_31] : memref<1x64xf32, #tpu.memory_space<vmem>>, vector<1x64xf32>
    %52 = vector.extract_strided_slice %50 {offsets = [1, 0], sizes = [3, 64], strides = [1, 1]} : vector<4x64xf32> to vector<3x64xf32>
    %cst_32 = arith.constant 0.000000e+00 : f32
    %53 = vector.broadcast %cst_32 : f32 to vector<1x64xf32>
    %54 = tpu.concatenate %52, %53 in 0 : vector<3x64xf32>, vector<1x64xf32> -> vector<4x64xf32>
    %c1_33 = arith.constant 1 : index
    %c0_34 = arith.constant 0 : index
    %c0_35 = arith.constant 0 : index
    %55 = vector.load %arg8[%c1_33, %c0_34, %c0_35] : memref<3x64x64xf32, #tpu.memory_space<vmem>>, vector<1x64x64xf32>
    %56 = vector.shape_cast %55 : vector<1x64x64xf32> to vector<64x64xf32>
    %cst_36 = arith.constant dense<0.000000e+00> : vector<4x64xf32>
    %57 = tpu.matmul %50, %56, %cst_36 {dimension_numbers = #tpu.dot_dimension_numbers<[1], [0], [0], [1], [0, 0, 1, 1], [], []>} : vector<4x64xf32>, vector<64x64xf32>, vector<4x64xf32> -> vector<4x64xf32>
    %58 = vector.broadcast %51 : vector<1x64xf32> to vector<4x64xf32>
    %59 = arith.addf %57, %58 : vector<4x64xf32>
    %cst_37 = arith.constant 0.000000e+00 : f32
    %60 = vector.broadcast %cst_37 : f32 to vector<4x64xf32>
    %61 = arith.cmpf oge, %59, %60 : vector<4x64xf32>
    %cst_38 = arith.constant 0.00999999977 : f32
    %62 = vector.broadcast %cst_38 : f32 to vector<4x64xf32>
    %63 = arith.mulf %62, %59 : vector<4x64xf32>
    %64 = arith.select %61, %59, %63 : vector<4x64xi1>, vector<4x64xf32>
    %c2_39 = arith.constant 2 : index
    %c0_40 = arith.constant 0 : index
    %c0_41 = arith.constant 0 : index
    %65 = vector.load %arg8[%c2_39, %c0_40, %c0_41] : memref<3x64x64xf32, #tpu.memory_space<vmem>>, vector<1x64x64xf32>
    %66 = vector.shape_cast %65 : vector<1x64x64xf32> to vector<64x64xf32>
    %cst_42 = arith.constant dense<0.000000e+00> : vector<4x64xf32>
    %67 = tpu.matmul %50, %66, %cst_42 {dimension_numbers = #tpu.dot_dimension_numbers<[1], [0], [0], [1], [0, 0, 1, 1], [], []>} : vector<4x64xf32>, vector<64x64xf32>, vector<4x64xf32> -> vector<4x64xf32>
    %c0_43 = arith.constant 0 : index
    %c0_44 = arith.constant 0 : index
    %c0_45 = arith.constant 0 : index
    %68 = vector.load %arg8[%c0_43, %c0_44, %c0_45] : memref<3x64x64xf32, #tpu.memory_space<vmem>>, vector<1x64x64xf32>
    %69 = vector.shape_cast %68 : vector<1x64x64xf32> to vector<64x64xf32>
    %cst_46 = arith.constant dense<0.000000e+00> : vector<4x64xf32>
    %70 = tpu.matmul %54, %69, %cst_46 {dimension_numbers = #tpu.dot_dimension_numbers<[1], [0], [0], [1], [0, 0, 1, 1], [], []>} : vector<4x64xf32>, vector<64x64xf32>, vector<4x64xf32> -> vector<4x64xf32>
    %71 = arith.addf %67, %70 : vector<4x64xf32>
    %72 = vector.broadcast %51 : vector<1x64xf32> to vector<4x64xf32>
    %73 = arith.addf %71, %72 : vector<4x64xf32>
    %cst_47 = arith.constant 0.000000e+00 : f32
    %74 = vector.broadcast %cst_47 : f32 to vector<4x64xf32>
    %75 = arith.cmpf oge, %73, %74 : vector<4x64xf32>
    %cst_48 = arith.constant 0.00999999977 : f32
    %76 = vector.broadcast %cst_48 : f32 to vector<4x64xf32>
    %77 = arith.mulf %76, %73 : vector<4x64xf32>
    %78 = arith.select %75, %73, %77 : vector<4x64xi1>, vector<4x64xf32>
    %79 = vector.extract_strided_slice %64 {offsets = [0, 0], sizes = [1, 64], strides = [1, 1]} : vector<4x64xf32> to vector<1x64xf32>
    %80 = vector.extract_strided_slice %78 {offsets = [0, 0], sizes = [1, 64], strides = [1, 1]} : vector<4x64xf32> to vector<1x64xf32>
    %81 = vector.extract_strided_slice %64 {offsets = [1, 0], sizes = [1, 64], strides = [1, 1]} : vector<4x64xf32> to vector<1x64xf32>
    %82 = vector.extract_strided_slice %78 {offsets = [1, 0], sizes = [1, 64], strides = [1, 1]} : vector<4x64xf32> to vector<1x64xf32>
    %83 = vector.extract_strided_slice %64 {offsets = [2, 0], sizes = [1, 64], strides = [1, 1]} : vector<4x64xf32> to vector<1x64xf32>
    %84 = vector.extract_strided_slice %78 {offsets = [2, 0], sizes = [1, 64], strides = [1, 1]} : vector<4x64xf32> to vector<1x64xf32>
    %85 = vector.extract_strided_slice %64 {offsets = [3, 0], sizes = [1, 64], strides = [1, 1]} : vector<4x64xf32> to vector<1x64xf32>
    %86 = vector.extract_strided_slice %78 {offsets = [3, 0], sizes = [1, 64], strides = [1, 1]} : vector<4x64xf32> to vector<1x64xf32>
    %87 = tpu.concatenate %79, %80, %81, %82, %83, %84, %85, %86 in 0 : vector<1x64xf32>, vector<1x64xf32>, vector<1x64xf32>, vector<1x64xf32>, vector<1x64xf32>, vector<1x64xf32>, vector<1x64xf32>, vector<1x64xf32> -> vector<8x64xf32>
    %c0_49 = arith.constant 0 : index
    %c0_50 = arith.constant 0 : index
    %88 = vector.load %arg11[%c0_49, %c0_50] : memref<1x128xf32, #tpu.memory_space<vmem>>, vector<1x128xf32>
    %89 = vector.extract_strided_slice %87 {offsets = [1, 0], sizes = [7, 64], strides = [1, 1]} : vector<8x64xf32> to vector<7x64xf32>
    %cst_51 = arith.constant 0.000000e+00 : f32
    %90 = vector.broadcast %cst_51 : f32 to vector<1x64xf32>
    %91 = tpu.concatenate %89, %90 in 0 : vector<7x64xf32>, vector<1x64xf32> -> vector<8x64xf32>
    %c1_52 = arith.constant 1 : index
    %c0_53 = arith.constant 0 : index
    %c0_54 = arith.constant 0 : index
    %92 = vector.load %arg10[%c1_52, %c0_53, %c0_54] : memref<3x64x128xf32, #tpu.memory_space<vmem>>, vector<1x64x128xf32>
    %93 = vector.shape_cast %92 : vector<1x64x128xf32> to vector<64x128xf32>
    %cst_55 = arith.constant dense<0.000000e+00> : vector<8x128xf32>
    %94 = tpu.matmul %87, %93, %cst_55 {dimension_numbers = #tpu.dot_dimension_numbers<[1], [0], [0], [1], [0, 0, 1, 1], [], []>} : vector<8x64xf32>, vector<64x128xf32>, vector<8x128xf32> -> vector<8x128xf32>
    %95 = vector.broadcast %88 : vector<1x128xf32> to vector<8x128xf32>
    %96 = arith.addf %94, %95 : vector<8x128xf32>
    %cst_56 = arith.constant 0.000000e+00 : f32
    %97 = vector.broadcast %cst_56 : f32 to vector<8x128xf32>
    %98 = arith.cmpf oge, %96, %97 : vector<8x128xf32>
    %cst_57 = arith.constant 0.00999999977 : f32
    %99 = vector.broadcast %cst_57 : f32 to vector<8x128xf32>
    %100 = arith.mulf %99, %96 : vector<8x128xf32>
    %101 = arith.select %98, %96, %100 : vector<8x128xi1>, vector<8x128xf32>
    %c2_58 = arith.constant 2 : index
    %c0_59 = arith.constant 0 : index
    %c0_60 = arith.constant 0 : index
    %102 = vector.load %arg10[%c2_58, %c0_59, %c0_60] : memref<3x64x128xf32, #tpu.memory_space<vmem>>, vector<1x64x128xf32>
    %103 = vector.shape_cast %102 : vector<1x64x128xf32> to vector<64x128xf32>
    %cst_61 = arith.constant dense<0.000000e+00> : vector<8x128xf32>
    %104 = tpu.matmul %87, %103, %cst_61 {dimension_numbers = #tpu.dot_dimension_numbers<[1], [0], [0], [1], [0, 0, 1, 1], [], []>} : vector<8x64xf32>, vector<64x128xf32>, vector<8x128xf32> -> vector<8x128xf32>
    %c0_62 = arith.constant 0 : index
    %c0_63 = arith.constant 0 : index
    %c0_64 = arith.constant 0 : index
    %105 = vector.load %arg10[%c0_62, %c0_63, %c0_64] : memref<3x64x128xf32, #tpu.memory_space<vmem>>, vector<1x64x128xf32>
    %106 = vector.shape_cast %105 : vector<1x64x128xf32> to vector<64x128xf32>
    %cst_65 = arith.constant dense<0.000000e+00> : vector<8x128xf32>
    %107 = tpu.matmul %91, %106, %cst_65 {dimension_numbers = #tpu.dot_dimension_numbers<[1], [0], [0], [1], [0, 0, 1, 1], [], []>} : vector<8x64xf32>, vector<64x128xf32>, vector<8x128xf32> -> vector<8x128xf32>
    %108 = arith.addf %104, %107 : vector<8x128xf32>
    %109 = vector.broadcast %88 : vector<1x128xf32> to vector<8x128xf32>
    %110 = arith.addf %108, %109 : vector<8x128xf32>
    %cst_66 = arith.constant 0.000000e+00 : f32
    %111 = vector.broadcast %cst_66 : f32 to vector<8x128xf32>
    %112 = arith.cmpf oge, %110, %111 : vector<8x128xf32>
    %cst_67 = arith.constant 0.00999999977 : f32
    %113 = vector.broadcast %cst_67 : f32 to vector<8x128xf32>
    %114 = arith.mulf %113, %110 : vector<8x128xf32>
    %115 = arith.select %112, %110, %114 : vector<8x128xi1>, vector<8x128xf32>
    %116 = vector.extract_strided_slice %101 {offsets = [0, 0], sizes = [1, 128], strides = [1, 1]} : vector<8x128xf32> to vector<1x128xf32>
    %117 = vector.extract_strided_slice %115 {offsets = [0, 0], sizes = [1, 128], strides = [1, 1]} : vector<8x128xf32> to vector<1x128xf32>
    %118 = vector.extract_strided_slice %101 {offsets = [1, 0], sizes = [1, 128], strides = [1, 1]} : vector<8x128xf32> to vector<1x128xf32>
    %119 = vector.extract_strided_slice %115 {offsets = [1, 0], sizes = [1, 128], strides = [1, 1]} : vector<8x128xf32> to vector<1x128xf32>
    %120 = vector.extract_strided_slice %101 {offsets = [2, 0], sizes = [1, 128], strides = [1, 1]} : vector<8x128xf32> to vector<1x128xf32>
    %121 = vector.extract_strided_slice %115 {offsets = [2, 0], sizes = [1, 128], strides = [1, 1]} : vector<8x128xf32> to vector<1x128xf32>
    %122 = vector.extract_strided_slice %101 {offsets = [3, 0], sizes = [1, 128], strides = [1, 1]} : vector<8x128xf32> to vector<1x128xf32>
    %123 = vector.extract_strided_slice %115 {offsets = [3, 0], sizes = [1, 128], strides = [1, 1]} : vector<8x128xf32> to vector<1x128xf32>
    %124 = vector.extract_strided_slice %101 {offsets = [4, 0], sizes = [1, 128], strides = [1, 1]} : vector<8x128xf32> to vector<1x128xf32>
    %125 = vector.extract_strided_slice %115 {offsets = [4, 0], sizes = [1, 128], strides = [1, 1]} : vector<8x128xf32> to vector<1x128xf32>
    %126 = vector.extract_strided_slice %101 {offsets = [5, 0], sizes = [1, 128], strides = [1, 1]} : vector<8x128xf32> to vector<1x128xf32>
    %127 = vector.extract_strided_slice %115 {offsets = [5, 0], sizes = [1, 128], strides = [1, 1]} : vector<8x128xf32> to vector<1x128xf32>
    %128 = vector.extract_strided_slice %101 {offsets = [6, 0], sizes = [1, 128], strides = [1, 1]} : vector<8x128xf32> to vector<1x128xf32>
    %129 = vector.extract_strided_slice %115 {offsets = [6, 0], sizes = [1, 128], strides = [1, 1]} : vector<8x128xf32> to vector<1x128xf32>
    %130 = vector.extract_strided_slice %101 {offsets = [7, 0], sizes = [1, 128], strides = [1, 1]} : vector<8x128xf32> to vector<1x128xf32>
    %131 = vector.extract_strided_slice %115 {offsets = [7, 0], sizes = [1, 128], strides = [1, 1]} : vector<8x128xf32> to vector<1x128xf32>
    %132 = tpu.concatenate %116, %117, %118, %119, %120, %121, %122, %123, %124, %125, %126, %127, %128, %129, %130, %131 in 0 : vector<1x128xf32>, vector<1x128xf32>, vector<1x128xf32>, vector<1x128xf32>, vector<1x128xf32>, vector<1x128xf32>, vector<1x128xf32>, vector<1x128xf32>, vector<1x128xf32>, vector<1x128xf32>, vector<1x128xf32>, vector<1x128xf32>, vector<1x128xf32>, vector<1x128xf32>, vector<1x128xf32>, vector<1x128xf32> -> vector<16x128xf32>
    %cst_68 = arith.constant 0.000000e+00 : f32
    %133 = vector.broadcast %cst_68 : f32 to vector<1x128xf32>
    %134 = vector.extract_strided_slice %132 {offsets = [0, 0], sizes = [15, 128], strides = [1, 1]} : vector<16x128xf32> to vector<15x128xf32>
    %135 = tpu.concatenate %133, %134 in 0 : vector<1x128xf32>, vector<15x128xf32> -> vector<16x128xf32>
    %136 = vector.extract_strided_slice %132 {offsets = [1, 0], sizes = [15, 128], strides = [1, 1]} : vector<16x128xf32> to vector<15x128xf32>
    %137 = tpu.concatenate %136, %133 in 0 : vector<15x128xf32>, vector<1x128xf32> -> vector<16x128xf32>
    %c0_69 = arith.constant 0 : index
    %c0_70 = arith.constant 0 : index
    %c0_71 = arith.constant 0 : index
    %138 = vector.load %arg12[%c0_69, %c0_70, %c0_71] : memref<3x128x48xf32, #tpu.memory_space<vmem>>, vector<1x128x48xf32>
    %139 = vector.shape_cast %138 : vector<1x128x48xf32> to vector<128x48xf32>
    %cst_72 = arith.constant dense<0.000000e+00> : vector<16x48xf32>
    %140 = tpu.matmul %135, %139, %cst_72 {dimension_numbers = #tpu.dot_dimension_numbers<[1], [0], [0], [1], [0, 0, 1, 1], [], []>} : vector<16x128xf32>, vector<128x48xf32>, vector<16x48xf32> -> vector<16x48xf32>
    %c1_73 = arith.constant 1 : index
    %c0_74 = arith.constant 0 : index
    %c0_75 = arith.constant 0 : index
    %141 = vector.load %arg12[%c1_73, %c0_74, %c0_75] : memref<3x128x48xf32, #tpu.memory_space<vmem>>, vector<1x128x48xf32>
    %142 = vector.shape_cast %141 : vector<1x128x48xf32> to vector<128x48xf32>
    %cst_76 = arith.constant dense<0.000000e+00> : vector<16x48xf32>
    %143 = tpu.matmul %132, %142, %cst_76 {dimension_numbers = #tpu.dot_dimension_numbers<[1], [0], [0], [1], [0, 0, 1, 1], [], []>} : vector<16x128xf32>, vector<128x48xf32>, vector<16x48xf32> -> vector<16x48xf32>
    %144 = arith.addf %140, %143 : vector<16x48xf32>
    %c2_77 = arith.constant 2 : index
    %c0_78 = arith.constant 0 : index
    %c0_79 = arith.constant 0 : index
    %145 = vector.load %arg12[%c2_77, %c0_78, %c0_79] : memref<3x128x48xf32, #tpu.memory_space<vmem>>, vector<1x128x48xf32>
    %146 = vector.shape_cast %145 : vector<1x128x48xf32> to vector<128x48xf32>
    %cst_80 = arith.constant dense<0.000000e+00> : vector<16x48xf32>
    %147 = tpu.matmul %137, %146, %cst_80 {dimension_numbers = #tpu.dot_dimension_numbers<[1], [0], [0], [1], [0, 0, 1, 1], [], []>} : vector<16x128xf32>, vector<128x48xf32>, vector<16x48xf32> -> vector<16x48xf32>
    %148 = arith.addf %144, %147 : vector<16x48xf32>
    %c0_81 = arith.constant 0 : index
    %c0_82 = arith.constant 0 : index
    %149 = vector.load %arg13[%c0_81, %c0_82] : memref<1x48xf32, #tpu.memory_space<vmem>>, vector<1x48xf32>
    %150 = vector.broadcast %149 : vector<1x48xf32> to vector<16x48xf32>
    %151 = arith.addf %148, %150 : vector<16x48xf32>
    %152 = math.tanh %151 : vector<16x48xf32>
    %153 = vector.extract_strided_slice %152 {offsets = [0, 0], sizes = [16, 16], strides = [1, 1]} : vector<16x48xf32> to vector<16x16xf32>
    %c0_83 = arith.constant 0 : index
    %c0_84 = arith.constant 0 : index
    %c0_85 = arith.constant 0 : index
    %c0_86 = arith.constant 0 : index
    %154 = vector.load %arg14[%c0_83, %c0_84, %c0_85, %c0_86] : memref<1x3x16x16xf32, #tpu.memory_space<vmem>>, vector<1x1x16x16xf32>
    %155 = vector.shape_cast %154 : vector<1x1x16x16xf32> to vector<16x16xf32>
    %156 = vector.shape_cast %153 : vector<16x16xf32> to vector<1x1x16x16xf32>
    tpu.vector_store %arg14[%c0_83, %c0_84, %c0_85, %c0_86], %156 {strides = array<i32>} : memref<1x3x16x16xf32, #tpu.memory_space<vmem>>, vector<1x1x16x16xf32>,
    %157 = vector.extract_strided_slice %152 {offsets = [0, 16], sizes = [16, 16], strides = [1, 1]} : vector<16x48xf32> to vector<16x16xf32>
    %c0_87 = arith.constant 0 : index
    %c1_88 = arith.constant 1 : index
    %c0_89 = arith.constant 0 : index
    %c0_90 = arith.constant 0 : index
    %158 = vector.load %arg14[%c0_87, %c1_88, %c0_89, %c0_90] : memref<1x3x16x16xf32, #tpu.memory_space<vmem>>, vector<1x1x16x16xf32>
    %159 = vector.shape_cast %158 : vector<1x1x16x16xf32> to vector<16x16xf32>
    %160 = vector.shape_cast %157 : vector<16x16xf32> to vector<1x1x16x16xf32>
    tpu.vector_store %arg14[%c0_87, %c1_88, %c0_89, %c0_90], %160 {strides = array<i32>} : memref<1x3x16x16xf32, #tpu.memory_space<vmem>>, vector<1x1x16x16xf32>,
    %161 = vector.extract_strided_slice %152 {offsets = [0, 32], sizes = [16, 16], strides = [1, 1]} : vector<16x48xf32> to vector<16x16xf32>
    %c0_91 = arith.constant 0 : index
    %c2_92 = arith.constant 2 : index
    %c0_93 = arith.constant 0 : index
    %c0_94 = arith.constant 0 : index
    %162 = vector.load %arg14[%c0_91, %c2_92, %c0_93, %c0_94] : memref<1x3x16x16xf32, #tpu.memory_space<vmem>>, vector<1x1x16x16xf32>
    %163 = vector.shape_cast %162 : vector<1x1x16x16xf32> to vector<16x16xf32>
    %164 = vector.shape_cast %161 : vector<16x16xf32> to vector<1x1x16x16xf32>
    tpu.vector_store %arg14[%c0_91, %c2_92, %c0_93, %c0_94], %164 {strides = array<i32>} : memref<1x3x16x16xf32, #tpu.memory_space<vmem>>, vector<1x1x16x16xf32>,
    return
  }
  func.func @transform_0(%arg0: i32) -> (i32, i32, i32) {
    %c0_i32 = arith.constant 0 : i32
    %c0_i32_0 = arith.constant 0 : i32
    %c0_i32_1 = arith.constant 0 : i32
    return %arg0, %c0_i32, %c0_i32_0 : i32, i32, i32
  }
  func.func @transform_1(%arg0: i32) -> (i32, i32) {
    %c0_i32 = arith.constant 0 : i32
    %c0_i32_0 = arith.constant 0 : i32
    %c0_i32_1 = arith.constant 0 : i32
    return %c0_i32, %c0_i32_0 : i32, i32
  }
  func.func @transform_2(%arg0: i32) -> (i32, i32) {
    %c0_i32 = arith.constant 0 : i32
    %c0_i32_0 = arith.constant 0 : i32
    %c0_i32_1 = arith.constant 0 : i32
    return %c0_i32, %c0_i32_0 : i32, i32
  }
  func.func @transform_3(%arg0: i32) -> (i32, i32) {
    %c0_i32 = arith.constant 0 : i32
    %c0_i32_0 = arith.constant 0 : i32
    %c0_i32_1 = arith.constant 0 : i32
    return %c0_i32, %c0_i32_0 : i32, i32
  }
  func.func @transform_4(%arg0: i32) -> (i32, i32) {
    %c0_i32 = arith.constant 0 : i32
    %c0_i32_0 = arith.constant 0 : i32
    %c0_i32_1 = arith.constant 0 : i32
    return %c0_i32, %c0_i32_0 : i32, i32
  }
  func.func @transform_5(%arg0: i32) -> (i32, i32, i32) {
    %c0_i32 = arith.constant 0 : i32
    %c0_i32_0 = arith.constant 0 : i32
    %c0_i32_1 = arith.constant 0 : i32
    %c0_i32_2 = arith.constant 0 : i32
    return %c0_i32, %c0_i32_0, %c0_i32_1 : i32, i32, i32
  }
  func.func @transform_6(%arg0: i32) -> (i32, i32) {
    %c0_i32 = arith.constant 0 : i32
    %c0_i32_0 = arith.constant 0 : i32
    %c0_i32_1 = arith.constant 0 : i32
    return %c0_i32, %c0_i32_0 : i32, i32
  }
  func.func @transform_7(%arg0: i32) -> (i32, i32, i32) {
    %c0_i32 = arith.constant 0 : i32
    %c0_i32_0 = arith.constant 0 : i32
    %c0_i32_1 = arith.constant 0 : i32
    %c0_i32_2 = arith.constant 0 : i32
    return %c0_i32, %c0_i32_0, %c0_i32_1 : i32, i32, i32
  }
  func.func @transform_8(%arg0: i32) -> (i32, i32) {
    %c0_i32 = arith.constant 0 : i32
    %c0_i32_0 = arith.constant 0 : i32
    %c0_i32_1 = arith.constant 0 : i32
    return %c0_i32, %c0_i32_0 : i32, i32
  }
  func.func @transform_9(%arg0: i32) -> (i32, i32, i32) {
    %c0_i32 = arith.constant 0 : i32
    %c0_i32_0 = arith.constant 0 : i32
    %c0_i32_1 = arith.constant 0 : i32
    %c0_i32_2 = arith.constant 0 : i32
    return %c0_i32, %c0_i32_0, %c0_i32_1 : i32, i32, i32
  }
  func.func @transform_10(%arg0: i32) -> (i32, i32) {
    %c0_i32 = arith.constant 0 : i32
    %c0_i32_0 = arith.constant 0 : i32
    %c0_i32_1 = arith.constant 0 : i32
    return %c0_i32, %c0_i32_0 : i32, i32
  }
  func.func @transform_11(%arg0: i32) -> (i32, i32, i32) {
    %c0_i32 = arith.constant 0 : i32
    %c0_i32_0 = arith.constant 0 : i32
    %c0_i32_1 = arith.constant 0 : i32
    %c0_i32_2 = arith.constant 0 : i32
    return %c0_i32, %c0_i32_0, %c0_i32_1 : i32, i32, i32
  }
  func.func @transform_12(%arg0: i32) -> (i32, i32) {
    %c0_i32 = arith.constant 0 : i32
    %c0_i32_0 = arith.constant 0 : i32
    %c0_i32_1 = arith.constant 0 : i32
    return %c0_i32, %c0_i32_0 : i32, i32
  }
  func.func @transform_13(%arg0: i32) -> (i32, i32, i32, i32) {
    %c0_i32 = arith.constant 0 : i32
    %c0_i32_0 = arith.constant 0 : i32
    %c0_i32_1 = arith.constant 0 : i32
    %c0_i32_2 = arith.constant 0 : i32
    return %arg0, %c0_i32, %c0_i32_0, %c0_i32_1 : i32, i32, i32, i32
  }
}

</mosaic_0001>

<llo_original>
// kernel: decoder_forward.1
$region0: #{decoder_forward.1}
  #allocation0 [shape = 'u32[]', space=smem, size = 0x4, offset = 0x4, fixed_abs, tag = 'smem constant byte address 0x4 - core index']
  #allocation1 [shape = 'u32[72,128]{1,0:T(1,128)}', space=vmem, size = 0x9000, scoped, tag = 'internal scratch']
  %s0 = inlined_call_operand.hbm [shape: f32[2,1,32], index: 0, kind: input, shape index: {}]
  %s1 = inlined_call_operand.vmem [shape: f32[32,16], index: 1, kind: input, shape index: {}]
  %s2 = inlined_call_operand.vmem [shape: f32[1,16], index: 2, kind: input, shape index: {}]
  %s3 = inlined_call_operand.hbm [shape: f32[16,128], index: 3, kind: input, shape index: {}]
  %s4 = inlined_call_operand.vmem [shape: f32[1,128], index: 4, kind: input, shape index: {}]
  %s5 = inlined_call_operand.vmem [shape: f32[3,64,64], index: 5, kind: input, shape index: {}]
  %s6 = inlined_call_operand.hbm [shape: f32[1,64], index: 6, kind: input, shape index: {}]
  %s7 = inlined_call_operand.vmem [shape: f32[3,64,64], index: 7, kind: input, shape index: {}]
  %s8 = inlined_call_operand.vmem [shape: f32[1,64], index: 8, kind: input, shape index: {}]
  %s9 = inlined_call_operand.vmem [shape: f32[3,64,128], index: 9, kind: input, shape index: {}]
  %s10 = inlined_call_operand.vmem [shape: f32[1,128], index: 10, kind: input, shape index: {}]
  %s11 = inlined_call_operand.vmem [shape: f32[3,128,48], index: 11, kind: input, shape index: {}]
  %s12 = inlined_call_operand.hbm [shape: f32[1,48], index: 12, kind: input, shape index: {}]
  %s13 = inlined_call_operand.hbm [shape: f32[2,3,16,16], index: 13, kind: output, shape index: {}]
  %s14 = sld [smem:[#allocation0]]
  $region101: #{decoder_forward.1} parent=0
    _
  %s16 = ssub.s32 1, %s14
  %s17 = scalar_select 0, %s16, %s14
  $region1: #{decoder_forward.1} parent=0
    #allocation2 [shape = 'u8[1024]{0}', space=vmem, size = 0x400, scoped, tag = 'input window, operand 0']
    #allocation3 [shape = 's32[2]{0}', space=sflag, size = 0x8, scoped, tag = 'scoped memory for decoder_forward.1']
    #allocation4 [shape = 's32[2]{0}', space=sflag, size = 0x8, scoped, tag = 'scoped memory for decoder_forward.1']
    #allocation5 [shape = 'u8[8192]{0}', space=vmem, size = 0x2000, scoped, tag = 'input window, operand 3, single buffered']
    #allocation6 [shape = 's32[1]{0}', space=sflag, size = 0x4, scoped, tag = 'scoped memory for decoder_forward.1']
    #allocation7 [shape = 'u8[512]{0}', space=vmem, size = 0x400, scoped, tag = 'input window, operand 6, single buffered']
    #allocation8 [shape = 'u8[512]{0}', space=vmem, size = 0x400, scoped, tag = 'input window, operand 12, single buffered']
    #allocation9 [shape = 's32[1]{0}', space=sflag, size = 0x4, scoped, tag = 'scoped memory for decoder_forward.1']
    #allocation10 [shape = 'u8[49152]{0}', space=vmem, size = 0xc000, scoped, tag = 'output window, operand 0']
    %18 = vsyncpa [#allocation3], 0
    %s19 = scalar_lea.sflag [#allocation3], 1
    %20 = vsyncpa %s19, 0
    %21 = vsyncpa [#allocation6], 0
    %22 = vsyncpa [#allocation9], 0
    %23 = vsyncpa [#allocation4], 0
    %s24 = scalar_lea.sflag [#allocation4], 1
    %25 = vsyncpa %s24, 0
    loop: start=0, step=1, limit=4
    $region2: #{decoder_forward.1} parent=1 // loop_pre_header
      _
    $region3: #{decoder_forward.1} parent=1 // loop_header
      %s27 = sphi 0, %s31
      %p28 = scmp.ge.s32.totalorder %s27, 4
      %s37 = sphi 0, %s39
      %s40 = sphi 0, %s37
      %s41 = sphi 0, %s40
      %s57 = sphi 0, %s41
      %s61 = sphi 0, %s61
      %s63 = sphi 0, %s61
      %s64 = sphi 0, %s63
      %s78 = sphi 0, %s64
      %s82 = sphi 0, %s82
      %s84 = sphi 0, %s82
      %s85 = sphi 0, %s84
      %s99 = sphi 0, %s85
      %s103 = sphi 0, %s103
      %s105 = sphi 0, %s103
      %s106 = sphi 0, %s105
      %s120 = sphi 0, %s106
      %s124 = sphi 0, %s124
      %s126 = sphi 0, %s124
      %s127 = sphi 0, %s126
      %s141 = sphi 0, %s127
      %s145 = sphi 0, %s145
      %s147 = sphi 0, %s145
      %s148 = sphi 0, %s147
      %s162 = sphi 0, %s148
      %s166 = sphi 0, %s166
      %s168 = sphi 0, %s166
      %s169 = sphi 0, %s168
      %s183 = sphi 0, %s169
      %s187 = sphi 0, %s187
      %s189 = sphi 0, %s187
      %s190 = sphi 0, %s189
      %s204 = sphi 0, %s190
      %s208 = sphi 0, %s208
      %s210 = sphi 0, %s208
      %s211 = sphi 0, %s210
      %s225 = sphi 0, %s211
      %s229 = sphi 0, %s229
      %s231 = sphi 0, %s229
      %s232 = sphi 0, %s231
      %s246 = sphi 0, %s232
      %s250 = sphi 0, %s250
      %s252 = sphi 0, %s250
      %s253 = sphi 0, %s252
      %s267 = sphi 0, %s253
      %s271 = sphi 0, %s271
      %s273 = sphi 0, %s271
      %s274 = sphi 0, %s273
      %s288 = sphi 0, %s274
      %s292 = sphi 0, %s292
      %s294 = sphi 0, %s292
      %s295 = sphi 0, %s294
      %s309 = sphi 0, %s295
      %s315 = sphi 0, %s317
      %s318 = sphi 0, %s315
      %s319 = sphi 0, %s318
      %s335 = sphi 0, %s319
    $region4: #{decoder_forward.1} parent=1 // loop_header_branch
      %30 = sbr.rel (%p28) target = $region8
    $region5: #{decoder_forward.1} parent=1 // loop_body
      %s32 = ssub.s32 %s27, 1
      %s33 = ssub.s32 %s27, 2
      %s34 = sadd.s32 %s27, 1
      %s35 = ssub.s32 %s27, %s34
      %p36 = scmp.eq.s32.totalorder %s35, 0
      %s38 = sadd.s32 %s37, 1
      %s39 = scalar_select %p36, %s37, %s38
      %p42 = pneg %p36
      %p43 = scmp.eq.s32.totalorder %s27, 1
      %p44 = por %p42, %p43
      %p45 = scmp.ne.s32.totalorder %s37, %s40
      %p46 = scmp.eq.s32.totalorder %s27, 0
      %p47 = por %p45, %p46
      %p48 = scmp.ne.s32.totalorder %s37, %s40
      %p49 = scmp.eq.s32.totalorder %s32, 1
      %p50 = por %p48, %p49
      %p51 = scmp.ne.s32.totalorder %s40, %s41
      %p52 = scmp.eq.s32.totalorder %s32, 0
      %p53 = por %p51, %p52
      %p54 = scmp.ne.s32.totalorder %s40, %s41
      %p55 = scmp.eq.s32.totalorder %s33, 1
      %p56 = por %p54, %p55
      %p58 = scmp.ne.s32.totalorder %s41, %s57
      %p59 = scmp.eq.s32.totalorder %s33, 0
      %p60 = por %p58, %p59
      %s62 = sadd.s32 %s61, 1
      %p65 = scmp.eq.s32.totalorder %s27, 1
      %p66 = scmp.ne.s32.totalorder %s61, %s63
      %p67 = scmp.eq.s32.totalorder %s27, 0
      %p68 = por %p66, %p67
      %p69 = scmp.ne.s32.totalorder %s61, %s63
      %p70 = scmp.eq.s32.totalorder %s32, 1
      %p71 = por %p69, %p70
      %p72 = scmp.ne.s32.totalorder %s63, %s64
      %p73 = scmp.eq.s32.totalorder %s32, 0
      %p74 = por %p72, %p73
      %p75 = scmp.ne.s32.totalorder %s63, %s64
      %p76 = scmp.eq.s32.totalorder %s33, 1
      %p77 = por %p75, %p76
      %p79 = scmp.ne.s32.totalorder %s64, %s78
      %p80 = scmp.eq.s32.totalorder %s33, 0
      %p81 = por %p79, %p80
      %s83 = sadd.s32 %s82, 1
      %p86 = scmp.eq.s32.totalorder %s27, 1
      %p87 = scmp.ne.s32.totalorder %s82, %s84
      %p88 = scmp.eq.s32.totalorder %s27, 0
      %p89 = por %p87, %p88
      %p90 = scmp.ne.s32.totalorder %s82, %s84
      %p91 = scmp.eq.s32.totalorder %s32, 1
      %p92 = por %p90, %p91
      %p93 = scmp.ne.s32.totalorder %s84, %s85
      %p94 = scmp.eq.s32.totalorder %s32, 0
      %p95 = por %p93, %p94
      %p96 = scmp.ne.s32.totalorder %s84, %s85
      %p97 = scmp.eq.s32.totalorder %s33, 1
      %p98 = por %p96, %p97
      %p100 = scmp.ne.s32.totalorder %s85, %s99
      %p101 = scmp.eq.s32.totalorder %s33, 0
      %p102 = por %p100, %p101
      %s104 = sadd.s32 %s103, 1
      %p107 = scmp.eq.s32.totalorder %s27, 1
      %p108 = scmp.ne.s32.totalorder %s103, %s105
      %p109 = scmp.eq.s32.totalorder %s27, 0
      %p110 = por %p108, %p109
      %p111 = scmp.ne.s32.totalorder %s103, %s105
      %p112 = scmp.eq.s32.totalorder %s32, 1
      %p113 = por %p111, %p112
      %p114 = scmp.ne.s32.totalorder %s105, %s106
      %p115 = scmp.eq.s32.totalorder %s32, 0
      %p116 = por %p114, %p115
      %p117 = scmp.ne.s32.totalorder %s105, %s106
      %p118 = scmp.eq.s32.totalorder %s33, 1
      %p119 = por %p117, %p118
      %p121 = scmp.ne.s32.totalorder %s106, %s120
      %p122 = scmp.eq.s32.totalorder %s33, 0
      %p123 = por %p121, %p122
      %s125 = sadd.s32 %s124, 1
      %p128 = scmp.eq.s32.totalorder %s27, 1
      %p129 = scmp.ne.s32.totalorder %s124, %s126
      %p130 = scmp.eq.s32.totalorder %s27, 0
      %p131 = por %p129, %p130
      %p132 = scmp.ne.s32.totalorder %s124, %s126
      %p133 = scmp.eq.s32.totalorder %s32, 1
      %p134 = por %p132, %p133
      %p135 = scmp.ne.s32.totalorder %s126, %s127
      %p136 = scmp.eq.s32.totalorder %s32, 0
      %p137 = por %p135, %p136
      %p138 = scmp.ne.s32.totalorder %s126, %s127
      %p139 = scmp.eq.s32.totalorder %s33, 1
      %p140 = por %p138, %p139
      %p142 = scmp.ne.s32.totalorder %s127, %s141
      %p143 = scmp.eq.s32.totalorder %s33, 0
      %p144 = por %p142, %p143
      %s146 = sadd.s32 %s145, 1
      %p149 = scmp.eq.s32.totalorder %s27, 1
      %p150 = scmp.ne.s32.totalorder %s145, %s147
      %p151 = scmp.eq.s32.totalorder %s27, 0
      %p152 = por %p150, %p151
      %p153 = scmp.ne.s32.totalorder %s145, %s147
      %p154 = scmp.eq.s32.totalorder %s32, 1
      %p155 = por %p153, %p154
      %p156 = scmp.ne.s32.totalorder %s147, %s148
      %p157 = scmp.eq.s32.totalorder %s32, 0
      %p158 = por %p156, %p157
      %p159 = scmp.ne.s32.totalorder %s147, %s148
      %p160 = scmp.eq.s32.totalorder %s33, 1
      %p161 = por %p159, %p160
      %p163 = scmp.ne.s32.totalorder %s148, %s162
      %p164 = scmp.eq.s32.totalorder %s33, 0
      %p165 = por %p163, %p164
      %s167 = sadd.s32 %s166, 1
      %p170 = scmp.eq.s32.totalorder %s27, 1
      %p171 = scmp.ne.s32.totalorder %s166, %s168
      %p172 = scmp.eq.s32.totalorder %s27, 0
      %p173 = por %p171, %p172
      %p174 = scmp.ne.s32.totalorder %s166, %s168
      %p175 = scmp.eq.s32.totalorder %s32, 1
      %p176 = por %p174, %p175
      %p177 = scmp.ne.s32.totalorder %s168, %s169
      %p178 = scmp.eq.s32.totalorder %s32, 0
      %p179 = por %p177, %p178
      %p180 = scmp.ne.s32.totalorder %s168, %s169
      %p181 = scmp.eq.s32.totalorder %s33, 1
      %p182 = por %p180, %p181
      %p184 = scmp.ne.s32.totalorder %s169, %s183
      %p185 = scmp.eq.s32.totalorder %s33, 0
      %p186 = por %p184, %p185
      %s188 = sadd.s32 %s187, 1
      %p191 = scmp.eq.s32.totalorder %s27, 1
      %p192 = scmp.ne.s32.totalorder %s187, %s189
      %p193 = scmp.eq.s32.totalorder %s27, 0
      %p194 = por %p192, %p193
      %p195 = scmp.ne.s32.totalorder %s187, %s189
      %p196 = scmp.eq.s32.totalorder %s32, 1
      %p197 = por %p195, %p196
      %p198 = scmp.ne.s32.totalorder %s189, %s190
      %p199 = scmp.eq.s32.totalorder %s32, 0
      %p200 = por %p198, %p199
      %p201 = scmp.ne.s32.totalorder %s189, %s190
      %p202 = scmp.eq.s32.totalorder %s33, 1
      %p203 = por %p201, %p202
      %p205 = scmp.ne.s32.totalorder %s190, %s204
      %p206 = scmp.eq.s32.totalorder %s33, 0
      %p207 = por %p205, %p206
      %s209 = sadd.s32 %s208, 1
      %p212 = scmp.eq.s32.totalorder %s27, 1
      %p213 = scmp.ne.s32.totalorder %s208, %s210
      %p214 = scmp.eq.s32.totalorder %s27, 0
      %p215 = por %p213, %p214
      %p216 = scmp.ne.s32.totalorder %s208, %s210
      %p217 = scmp.eq.s32.totalorder %s32, 1
      %p218 = por %p216, %p217
      %p219 = scmp.ne.s32.totalorder %s210, %s211
      %p220 = scmp.eq.s32.totalorder %s32, 0
      %p221 = por %p219, %p220
      %p222 = scmp.ne.s32.totalorder %s210, %s211
      %p223 = scmp.eq.s32.totalorder %s33, 1
      %p224 = por %p222, %p223
      %p226 = scmp.ne.s32.totalorder %s211, %s225
      %p227 = scmp.eq.s32.totalorder %s33, 0
      %p228 = por %p226, %p227
      %s230 = sadd.s32 %s229, 1
      %p233 = scmp.eq.s32.totalorder %s27, 1
      %p234 = scmp.ne.s32.totalorder %s229, %s231
      %p235 = scmp.eq.s32.totalorder %s27, 0
      %p236 = por %p234, %p235
      %p237 = scmp.ne.s32.totalorder %s229, %s231
      %p238 = scmp.eq.s32.totalorder %s32, 1
      %p239 = por %p237, %p238
      %p240 = scmp.ne.s32.totalorder %s231, %s232
      %p241 = scmp.eq.s32.totalorder %s32, 0
      %p242 = por %p240, %p241
      %p243 = scmp.ne.s32.totalorder %s231, %s232
      %p244 = scmp.eq.s32.totalorder %s33, 1
      %p245 = por %p243, %p244
      %p247 = scmp.ne.s32.totalorder %s232, %s246
      %p248 = scmp.eq.s32.totalorder %s33, 0
      %p249 = por %p247, %p248
      %s251 = sadd.s32 %s250, 1
      %p254 = scmp.eq.s32.totalorder %s27, 1
      %p255 = scmp.ne.s32.totalorder %s250, %s252
      %p256 = scmp.eq.s32.totalorder %s27, 0
      %p257 = por %p255, %p256
      %p258 = scmp.ne.s32.totalorder %s250, %s252
      %p259 = scmp.eq.s32.totalorder %s32, 1
      %p260 = por %p258, %p259
      %p261 = scmp.ne.s32.totalorder %s252, %s253
      %p262 = scmp.eq.s32.totalorder %s32, 0
      %p263 = por %p261, %p262
      %p264 = scmp.ne.s32.totalorder %s252, %s253
      %p265 = scmp.eq.s32.totalorder %s33, 1
      %p266 = por %p264, %p265
      %p268 = scmp.ne.s32.totalorder %s253, %s267
      %p269 = scmp.eq.s32.totalorder %s33, 0
      %p270 = por %p268, %p269
      %s272 = sadd.s32 %s271, 1
      %p275 = scmp.eq.s32.totalorder %s27, 1
      %p276 = scmp.ne.s32.totalorder %s271, %s273
      %p277 = scmp.eq.s32.totalorder %s27, 0
      %p278 = por %p276, %p277
      %p279 = scmp.ne.s32.totalorder %s271, %s273
      %p280 = scmp.eq.s32.totalorder %s32, 1
      %p281 = por %p279, %p280
      %p282 = scmp.ne.s32.totalorder %s273, %s274
      %p283 = scmp.eq.s32.totalorder %s32, 0
      %p284 = por %p282, %p283
      %p285 = scmp.ne.s32.totalorder %s273, %s274
      %p286 = scmp.eq.s32.totalorder %s33, 1
      %p287 = por %p285, %p286
      %p289 = scmp.ne.s32.totalorder %s274, %s288
      %p290 = scmp.eq.s32.totalorder %s33, 0
      %p291 = por %p289, %p290
      %s293 = sadd.s32 %s292, 1
      %p296 = scmp.eq.s32.totalorder %s27, 1
      %p297 = scmp.ne.s32.totalorder %s292, %s294
      %p298 = scmp.eq.s32.totalorder %s27, 0
      %p299 = por %p297, %p298
      %p300 = scmp.ne.s32.totalorder %s292, %s294
      %p301 = scmp.eq.s32.totalorder %s32, 1
      %p302 = por %p300, %p301
      %p303 = scmp.ne.s32.totalorder %s294, %s295
      %p304 = scmp.eq.s32.totalorder %s32, 0
      %p305 = por %p303, %p304
      %p306 = scmp.ne.s32.totalorder %s294, %s295
      %p307 = scmp.eq.s32.totalorder %s33, 1
      %p308 = por %p306, %p307
      %p310 = scmp.ne.s32.totalorder %s295, %s309
      %p311 = scmp.eq.s32.totalorder %s33, 0
      %p312 = por %p310, %p311
      %s313 = ssub.s32 %s27, %s34
      %p314 = scmp.eq.s32.totalorder %s313, 0
      %s316 = sadd.s32 %s315, 1
      %s317 = scalar_select %p314, %s315, %s316
      %p320 = pneg %p314
      %p321 = scmp.eq.s32.totalorder %s27, 1
      %p322 = por %p320, %p321
      %p323 = scmp.ne.s32.totalorder %s315, %s318
      %p324 = scmp.eq.s32.totalorder %s27, 0
      %p325 = por %p323, %p324
      %p326 = scmp.ne.s32.totalorder %s315, %s318
      %p327 = scmp.eq.s32.totalorder %s32, 1
      %p328 = por %p326, %p327
      %p329 = scmp.ne.s32.totalorder %s318, %s319
      %p330 = scmp.eq.s32.totalorder %s32, 0
      %p331 = por %p329, %p330
      %p332 = scmp.ne.s32.totalorder %s318, %s319
      %p333 = scmp.eq.s32.totalorder %s33, 1
      %p334 = por %p332, %p333
      %p336 = scmp.ne.s32.totalorder %s319, %s335
      %p337 = scmp.eq.s32.totalorder %s33, 0
      %p338 = por %p336, %p337
      %p339 = scmp.le.s32.totalorder 1, %s27
      %p340 = scmp.lt.s32.totalorder %s27, 3
      %p341 = pnand %p339, %p340
      %p342 = pneg %p341
      // Predicated region
      $region9: #{decoder_forward.1} parent=5 // pred_check
        _
      $region10: #{decoder_forward.1} parent=5 // pred_check_branch
        %344 = sbr.rel (%p341) target = $region12
      $region11: #{decoder_forward.1} parent=5 // pred_region
        %s345 = ssub.s32 %s27, 1
        // Predicated region
        $region13: #{decoder_forward.1} parent=11 // pred_check
          %p346 = pneg %p74
        $region14: #{decoder_forward.1} parent=11 // pred_check_branch
          %348 = sbr.rel (%p346) target = $region16
        $region15: #{decoder_forward.1} parent=11 // pred_region
          _
        $region16: #{decoder_forward.1} parent=11 // pred_fallthru
          _
        // Predicated region
        $region17: #{decoder_forward.1} parent=11 // pred_check
          %p349 = pneg %p95
        $region18: #{decoder_forward.1} parent=11 // pred_check_branch
          %351 = sbr.rel (%p349) target = $region20
        $region19: #{decoder_forward.1} parent=11 // pred_region
          _
        $region20: #{decoder_forward.1} parent=11 // pred_fallthru
          _
        // Predicated region
        $region21: #{decoder_forward.1} parent=11 // pred_check
          %p352 = pneg %p116
        $region22: #{decoder_forward.1} parent=11 // pred_check_branch
          %354 = sbr.rel (%p352) target = $region24
        $region23: #{decoder_forward.1} parent=11 // pred_region
          %356 = vsyncadd [#allocation6], 0
          %s357 = sshll.u32 %s3, 4
          %s358 = int_to_ptr.hbm [resolvable:$true] %s357
          %s359 = sshll.u32 [#allocation5], 4
          %s360 = int_to_ptr.vmem [resolvable:$true] %s359
          %365 = dma.hbm_to_vmem [thread:$0]  %s358, 256, %s360, [#allocation6], 128, 128, 8
        $region24: #{decoder_forward.1} parent=11 // pred_fallthru
          _
        // Predicated region
        $region25: #{decoder_forward.1} parent=11 // pred_check
          %p366 = pneg %p137
        $region26: #{decoder_forward.1} parent=11 // pred_check_branch
          %368 = sbr.rel (%p366) target = $region28
        $region27: #{decoder_forward.1} parent=11 // pred_region
          _
        $region28: #{decoder_forward.1} parent=11 // pred_fallthru
          _
        // Predicated region
        $region29: #{decoder_forward.1} parent=11 // pred_check
          %p369 = pneg %p158
        $region30: #{decoder_forward.1} parent=11 // pred_check_branch
          %371 = sbr.rel (%p369) target = $region32
        $region31: #{decoder_forward.1} parent=11 // pred_region
          _
        $region32: #{decoder_forward.1} parent=11 // pred_fallthru
          _
        // Predicated region
        $region33: #{decoder_forward.1} parent=11 // pred_check
          %p372 = pneg %p179
        $region34: #{decoder_forward.1} parent=11 // pred_check_branch
          %374 = sbr.rel (%p372) target = $region36
        $region35: #{decoder_forward.1} parent=11 // pred_region
          %376 = vsyncadd [#allocation6], 0
          %s378 = sshll.u32 %s6, 4
          %s379 = int_to_ptr.hbm [resolvable:$true] %s378
          %s380 = sshll.u32 [#allocation7], 4
          %s381 = int_to_ptr.vmem [resolvable:$true] %s380
          %383 = dma.hbm_to_vmem [thread:$0]  %s379, 16, %s381, [#allocation6]
        $region36: #{decoder_forward.1} parent=11 // pred_fallthru
          _
        // Predicated region
        $region37: #{decoder_forward.1} parent=11 // pred_check
          %p384 = pneg %p200
        $region38: #{decoder_forward.1} parent=11 // pred_check_branch
          %386 = sbr.rel (%p384) target = $region40
        $region39: #{decoder_forward.1} parent=11 // pred_region
          _
        $region40: #{decoder_forward.1} parent=11 // pred_fallthru
          _
        // Predicated region
        $region41: #{decoder_forward.1} parent=11 // pred_check
          %p387 = pneg %p221
        $region42: #{decoder_forward.1} parent=11 // pred_check_branch
          %389 = sbr.rel (%p387) target = $region44
        $region43: #{decoder_forward.1} parent=11 // pred_region
          _
        $region44: #{decoder_forward.1} parent=11 // pred_fallthru
          _
        // Predicated region
        $region45: #{decoder_forward.1} parent=11 // pred_check
          %p390 = pneg %p242
        $region46: #{decoder_forward.1} parent=11 // pred_check_branch
          %392 = sbr.rel (%p390) target = $region48
        $region47: #{decoder_forward.1} parent=11 // pred_region
          _
        $region48: #{decoder_forward.1} parent=11 // pred_fallthru
          _
        // Predicated region
        $region49: #{decoder_forward.1} parent=11 // pred_check
          %p393 = pneg %p263
        $region50: #{decoder_forward.1} parent=11 // pred_check_branch
          %395 = sbr.rel (%p393) target = $region52
        $region51: #{decoder_forward.1} parent=11 // pred_region
          _
        $region52: #{decoder_forward.1} parent=11 // pred_fallthru
          _
        // Predicated region
        $region53: #{decoder_forward.1} parent=11 // pred_check
          %p396 = pneg %p284
        $region54: #{decoder_forward.1} parent=11 // pred_check_branch
          %398 = sbr.rel (%p396) target = $region56
        $region55: #{decoder_forward.1} parent=11 // pred_region
          _
        $region56: #{decoder_forward.1} parent=11 // pred_fallthru
          _
        // Predicated region
        $region57: #{decoder_forward.1} parent=11 // pred_check
          %p399 = pneg %p305
        $region58: #{decoder_forward.1} parent=11 // pred_check_branch
          %401 = sbr.rel (%p399) target = $region60
        $region59: #{decoder_forward.1} parent=11 // pred_region
          %403 = vsyncadd [#allocation9], 0
          %s405 = sshll.u32 %s12, 4
          %s406 = int_to_ptr.hbm [resolvable:$true] %s405
          %s407 = sshll.u32 [#allocation8], 4
          %s408 = int_to_ptr.vmem [resolvable:$true] %s407
          %410 = dma.hbm_to_vmem [thread:$0]  %s406, 16, %s408, [#allocation9]
        $region60: #{decoder_forward.1} parent=11 // pred_fallthru
          _
      $region12: #{decoder_forward.1} parent=5 // pred_fallthru
        _
      %p411 = scmp.lt.s32.totalorder %s27, 2
      // Predicated region
      $region61: #{decoder_forward.1} parent=5 // pred_check
        %p412 = pneg %p411
      $region62: #{decoder_forward.1} parent=5 // pred_check_branch
        %414 = sbr.rel (%p412) target = $region64
      $region63: #{decoder_forward.1} parent=5 // pred_region
        // Predicated region
        $region65: #{decoder_forward.1} parent=63 // pred_check
          %p415 = pneg %p47
        $region66: #{decoder_forward.1} parent=63 // pred_check_branch
          %417 = sbr.rel (%p415) target = $region68
        $region67: #{decoder_forward.1} parent=63 // pred_region
          %s418 = sand.u32 %s37, 1
          %s419 = scalar_lea.sflag [#allocation3], %s418
          %s420 = sand.u32 %s37, 1
          %s421 = scalar_lea.vmem [#allocation2], %s420
          %423 = vsyncadd %s419, 0
          %s424 = scalar_lea.hbm %s0, %s27
          %s426 = sshll.u32 %s424, 4
          %s427 = int_to_ptr.hbm [resolvable:$true] %s426
          %s428 = sshll.u32 %s421, 4
          %s429 = int_to_ptr.vmem [resolvable:$true] %s428
          %431 = dma.hbm_to_vmem [thread:$0]  %s427, 16, %s429, %s419
        $region68: #{decoder_forward.1} parent=63 // pred_fallthru
          _
      $region64: #{decoder_forward.1} parent=5 // pred_fallthru
        _
      %p432 = scmp.le.s32.totalorder 1, %s27
      %p433 = scmp.lt.s32.totalorder %s27, 3
      %p434 = pnand %p432, %p433
      %p435 = pneg %p434
      // Predicated region
      $region69: #{decoder_forward.1} parent=5 // pred_check
        _
      $region70: #{decoder_forward.1} parent=5 // pred_check_branch
        %437 = sbr.rel (%p434) target = $region72
      $region71: #{decoder_forward.1} parent=5 // pred_region
        %s438 = ssub.s32 %s27, 1
        %s439 = sand.u32 %s40, 1
        %s440 = scalar_lea.sflag [#allocation3], %s439
        %s441 = sand.u32 %s40, 1
        %s442 = scalar_lea.vmem [#allocation2], %s441
        // Predicated region
        $region73: #{decoder_forward.1} parent=71 // pred_check
          %p443 = pneg %p53
        $region74: #{decoder_forward.1} parent=71 // pred_check_branch
          %445 = sbr.rel (%p443) target = $region76
        $region75: #{decoder_forward.1} parent=71 // pred_region
          %447 = dma.done %s440, 16
        $region76: #{decoder_forward.1} parent=71 // pred_fallthru
          _
        // Predicated region
        $region77: #{decoder_forward.1} parent=71 // pred_check
          %p448 = pneg %p116
        $region78: #{decoder_forward.1} parent=71 // pred_check_branch
          %450 = sbr.rel (%p448) target = $region80
        $region79: #{decoder_forward.1} parent=71 // pred_region
          %452 = dma.done [#allocation6], 256
        $region80: #{decoder_forward.1} parent=71 // pred_fallthru
          _
        // Predicated region
        $region81: #{decoder_forward.1} parent=71 // pred_check
          %p453 = pneg %p179
        $region82: #{decoder_forward.1} parent=71 // pred_check_branch
          %455 = sbr.rel (%p453) target = $region84
        $region83: #{decoder_forward.1} parent=71 // pred_region
          %457 = dma.done [#allocation6], 16
        $region84: #{decoder_forward.1} parent=71 // pred_fallthru
          _
        // Predicated region
        $region85: #{decoder_forward.1} parent=71 // pred_check
          %p458 = pneg %p305
        $region86: #{decoder_forward.1} parent=71 // pred_check_branch
          %460 = sbr.rel (%p458) target = $region88
        $region87: #{decoder_forward.1} parent=71 // pred_region
          %462 = dma.done [#allocation9], 16
        $region88: #{decoder_forward.1} parent=71 // pred_fallthru
          _
        %s463 = sand.u32 %s40, 1
        %s464 = scalar_lea.sflag [#allocation3], %s463
        %s465 = sand.u32 %s40, 1
        %s466 = scalar_lea.vmem [#allocation2], %s465
        %p467 = pneg %p53
        %p468 = pneg %p50
        %p469 = pneg %p74
        %p470 = pneg %p71
        %p471 = pneg %p95
        %p472 = pneg %p92
        %p473 = pneg %p116
        %p474 = pneg %p113
        %p475 = pneg %p137
        %p476 = pneg %p134
        %p477 = pneg %p158
        %p478 = pneg %p155
        %p479 = pneg %p179
        %p480 = pneg %p176
        %p481 = pneg %p200
        %p482 = pneg %p197
        %p483 = pneg %p221
        %p484 = pneg %p218
        %p485 = pneg %p242
        %p486 = pneg %p239
        %p487 = pneg %p263
        %p488 = pneg %p260
        %p489 = pneg %p284
        %p490 = pneg %p281
        %p491 = pneg %p305
        %p492 = pneg %p302
        %p493 = pneg %p331
        %p494 = pneg %p328
        %s495 = sand.u32 %s318, 1
        %s496 = scalar_lea.sflag [#allocation4], %s495
        %s497 = sand.u32 %s318, 1
        %s498 = smul.addr %s497, 48
        %s499 = scalar_lea.vmem [#allocation10], %s498
        %v500 = vld [vmem:[%s442] sm:$0x1]
        %v501 = vld [vmem:[%s1] sm:$0xff]
        %v502 = vld [vmem:[%s1 + $0x8] sm:$0xff]
        %v503 = vld [vmem:[%s1 + $0x10] sm:$0xff]
        %v504 = vld [vmem:[%s1 + $0x18] sm:$0xff]
        %v505 = vld [vmem:[%s2] sm:$0x1]
        %vm506 = vcmask 261120
        %v508 = vsel %vm506, %v500, 0
        %510 = vmatpush.msra.mxu0 0.0
        %511 = vmatpush.msra.mxu0 0.0
        %512 = vmatpush.msra.mxu0 0.0
        %513 = vmatpush.msra.mxu0 0.0
        %514 = vmatpush.msra.mxu0 0.0
        %515 = vmatpush.msra.mxu0 0.0
        %516 = vmatpush.msra.mxu0 0.0
        %517 = vmatpush.msra.mxu0 0.0
        %518 = vmatpush.msra.mxu0 0.0
        %519 = vmatpush.msra.mxu0 0.0
        %520 = vmatpush.msra.mxu0 0.0
        %521 = vmatpush.msra.mxu0 0.0
        %522 = vmatpush.msra.mxu0 %v504
        %523 = vmatpush.msra.mxu0 %v503
        %524 = vmatpush.msra.mxu0 %v502
        %525 = vmatpush.msra.mxu0 %v501
        %526 = vmatmul.f32.gmra.mxu0 %v508
        %v527 = vpop.f32.mrf.mxu0
        %v528 = vadd.f32 %v505, %v527
        %529 = vdwg.mxu0
        %vm530 = vcmp.ge.f32.partialorder %v528, 0.0
        %v531 = vmul.f32 %v528, 0.01
        %v532 = vsel %vm530, %v528, %v531
        %v533 = vld [vmem:[#allocation5] sm:$0xff]
        %v534 = vld [vmem:[#allocation5 + $0x8] sm:$0xff]
        %v535 = vld [vmem:[%s4] sm:$0x1]
        %vm536 = vcmask 130048
        %v538 = vsel %vm536, %v532, 0
        %540 = vmatpush.msra.mxu0 0.0
        %541 = vmatpush.msra.mxu0 0.0
        %542 = vmatpush.msra.mxu0 0.0
        %543 = vmatpush.msra.mxu0 0.0
        %544 = vmatpush.msra.mxu0 0.0
        %545 = vmatpush.msra.mxu0 0.0
        %546 = vmatpush.msra.mxu0 0.0
        %547 = vmatpush.msra.mxu0 0.0
        %548 = vmatpush.msra.mxu0 0.0
        %549 = vmatpush.msra.mxu0 0.0
        %550 = vmatpush.msra.mxu0 0.0
        %551 = vmatpush.msra.mxu0 0.0
        %552 = vmatpush.msra.mxu0 0.0
        %553 = vmatpush.msra.mxu0 0.0
        %554 = vmatpush.msra.mxu0 %v534
        %555 = vmatpush.msra.mxu0 %v533
        %556 = vmatmul.f32.gmra.mxu0 %v538
        %v557 = vpop.f32.mrf.mxu0
        %v558 = vadd.f32 %v535, %v557
        %559 = vdwg.mxu0
        %v561 = vrot.slane %v558, 7
        %562 = vrot.lane.b32.xlu0 %v561, 64
        %v563 = vpop.permute.xlu0 %562
        %vm565 = vcmask 1040384
        %v566 = vsel %vm565, %v558, %v563
        %v567 = vld [vmem:[#allocation7] sm:$0x1]
        %v569 = vrot.slane %v566, 1
        %v571 = vsel %vm565, %v569, 0.0
        %s572 = scalar_lea.vmem %s5, 64
        %v573 = vld [vmem:[%s572] sm:$0xff]
        %v574 = vld [vmem:[%s572 + $0x8] sm:$0xff]
        %v575 = vld [vmem:[%s572 + $0x10] sm:$0xff]
        %v576 = vld [vmem:[%s572 + $0x18] sm:$0xff]
        %v577 = vld [vmem:[%s572 + $0x20] sm:$0xff]
        %v578 = vld [vmem:[%s572 + $0x28] sm:$0xff]
        %v579 = vld [vmem:[%s572 + $0x30] sm:$0xff]
        %v580 = vld [vmem:[%s572 + $0x38] sm:$0xff]
        %v582 = vperm.slane %v567, 0
        %vm584 = vcmask 523264
        %v585 = vsel %vm584, %v566, 0
        %587 = vmatpush.msra.mxu0 0.0
        %588 = vmatpush.msra.mxu0 0.0
        %589 = vmatpush.msra.mxu0 0.0
        %590 = vmatpush.msra.mxu0 0.0
        %591 = vmatpush.msra.mxu0 0.0
        %592 = vmatpush.msra.mxu0 0.0
        %593 = vmatpush.msra.mxu0 0.0
        %594 = vmatpush.msra.mxu0 0.0
        %595 = vmatpush.msra.mxu0 %v580
        %596 = vmatpush.msra.mxu0 %v579
        %597 = vmatpush.msra.mxu0 %v578
        %598 = vmatpush.msra.mxu0 %v577
        %599 = vmatpush.msra.mxu0 %v576
        %600 = vmatpush.msra.mxu0 %v575
        %601 = vmatpush.msra.mxu0 %v574
        %602 = vmatpush.msra.mxu0 %v573
        %603 = vmatmul.f32.gmra.mxu0 %v585
        %v604 = vpop.f32.mrf.mxu0
        %v605 = vadd.f32 %v582, %v604
        %606 = vdwg.mxu0
        %vm607 = vcmp.ge.f32.partialorder %v605, 0.0
        %v608 = vmul.f32 %v605, 0.01
        %v609 = vsel %vm607, %v605, %v608
        %s610 = scalar_lea.vmem %s5, 128
        %v611 = vld [vmem:[%s610] sm:$0xff]
        %v612 = vld [vmem:[%s610 + $0x8] sm:$0xff]
        %v613 = vld [vmem:[%s610 + $0x10] sm:$0xff]
        %v614 = vld [vmem:[%s610 + $0x18] sm:$0xff]
        %v615 = vld [vmem:[%s610 + $0x20] sm:$0xff]
        %v616 = vld [vmem:[%s610 + $0x28] sm:$0xff]
        %v617 = vld [vmem:[%s610 + $0x30] sm:$0xff]
        %v618 = vld [vmem:[%s610 + $0x38] sm:$0xff]
        %v619 = vld [vmem:[%s5] sm:$0xff]
        %v620 = vld [vmem:[%s5 + $0x8] sm:$0xff]
        %v621 = vld [vmem:[%s5 + $0x10] sm:$0xff]
        %v622 = vld [vmem:[%s5 + $0x18] sm:$0xff]
        %v623 = vld [vmem:[%s5 + $0x20] sm:$0xff]
        %v624 = vld [vmem:[%s5 + $0x28] sm:$0xff]
        %v625 = vld [vmem:[%s5 + $0x30] sm:$0xff]
        %v626 = vld [vmem:[%s5 + $0x38] sm:$0xff]
        %v628 = vsel %vm584, %v571, 0
        %630 = vmatpush.msra.mxu0 0.0
        %631 = vmatpush.msra.mxu0 0.0
        %632 = vmatpush.msra.mxu0 0.0
        %633 = vmatpush.msra.mxu0 0.0
        %634 = vmatpush.msra.mxu0 0.0
        %635 = vmatpush.msra.mxu0 0.0
        %636 = vmatpush.msra.mxu0 0.0
        %637 = vmatpush.msra.mxu0 0.0
        %638 = vmatpush.msra.mxu0 %v626
        %639 = vmatpush.msra.mxu0 %v625
        %640 = vmatpush.msra.mxu0 %v624
        %641 = vmatpush.msra.mxu0 %v623
        %642 = vmatpush.msra.mxu0 %v622
        %643 = vmatpush.msra.mxu0 %v621
        %644 = vmatpush.msra.mxu0 %v620
        %645 = vmatpush.msra.mxu0 %v619
        %646 = vmatmul.f32.gmra.mxu0 %v628
        %v647 = vpop.f32.mrf.mxu0
        %v648 = vadd.f32 0.0, %v647
        %649 = vdwg.mxu0
        %650 = vmatpush.msra.mxu0 0.0
        %651 = vmatpush.msra.mxu0 0.0
        %652 = vmatpush.msra.mxu0 0.0
        %653 = vmatpush.msra.mxu0 0.0
        %654 = vmatpush.msra.mxu0 0.0
        %655 = vmatpush.msra.mxu0 0.0
        %656 = vmatpush.msra.mxu0 0.0
        %657 = vmatpush.msra.mxu0 0.0
        %658 = vmatpush.msra.mxu0 %v618
        %659 = vmatpush.msra.mxu0 %v617
        %660 = vmatpush.msra.mxu0 %v616
        %661 = vmatpush.msra.mxu0 %v615
        %662 = vmatpush.msra.mxu0 %v614
        %663 = vmatpush.msra.mxu0 %v613
        %664 = vmatpush.msra.mxu0 %v612
        %665 = vmatpush.msra.mxu0 %v611
        %666 = vmatmul.f32.gmra.mxu0 %v585
        %v667 = vpop.f32.mrf.mxu0
        %v668 = vadd.f32 %v648, %v667
        %669 = vdwg.mxu0
        %v670 = vadd.f32 %v668, %v582
        %vm671 = vcmp.ge.f32.partialorder %v670, 0.0
        %v672 = vmul.f32 %v670, 0.01
        %v673 = vsel %vm671, %v670, %v672
        %v675 = vrot.slane %v673, 7
        %v678 = vrot.slane %v609, 7
        %v680 = vrot.slane %v673, 6
        %v682 = vsel %vm565, %v609, %v675
        %vm683 = vcmask 1041408
        %v684 = vsel %vm683, %v682, %v678
        %vm685 = vcmask 1042432
        %v686 = vsel %vm685, %v684, %v680
        %v687 = vld [vmem:[%s8] sm:$0x1]
        %v689 = vrot.slane %v686, 1
        %v691 = vsel %vm685, %v689, 0.0
        %s692 = scalar_lea.vmem %s7, 64
        %v693 = vld [vmem:[%s692] sm:$0xff]
        %v694 = vld [vmem:[%s692 + $0x8] sm:$0xff]
        %v695 = vld [vmem:[%s692 + $0x10] sm:$0xff]
        %v696 = vld [vmem:[%s692 + $0x18] sm:$0xff]
        %v697 = vld [vmem:[%s692 + $0x20] sm:$0xff]
        %v698 = vld [vmem:[%s692 + $0x28] sm:$0xff]
        %v699 = vld [vmem:[%s692 + $0x30] sm:$0xff]
        %v700 = vld [vmem:[%s692 + $0x38] sm:$0xff]
        %v702 = vperm.slane %v687, 0
        %v704 = vsel %vm584, %v686, 0
        %706 = vmatpush.msra.mxu0 0.0
        %707 = vmatpush.msra.mxu0 0.0
        %708 = vmatpush.msra.mxu0 0.0
        %709 = vmatpush.msra.mxu0 0.0
        %710 = vmatpush.msra.mxu0 0.0
        %711 = vmatpush.msra.mxu0 0.0
        %712 = vmatpush.msra.mxu0 0.0
        %713 = vmatpush.msra.mxu0 0.0
        %714 = vmatpush.msra.mxu0 %v700
        %715 = vmatpush.msra.mxu0 %v699
        %716 = vmatpush.msra.mxu0 %v698
        %717 = vmatpush.msra.mxu0 %v697
        %718 = vmatpush.msra.mxu0 %v696
        %719 = vmatpush.msra.mxu0 %v695
        %720 = vmatpush.msra.mxu0 %v694
        %721 = vmatpush.msra.mxu0 %v693
        %722 = vmatmul.f32.gmra.mxu0 %v704
        %v723 = vpop.f32.mrf.mxu0
        %v724 = vadd.f32 %v702, %v723
        %725 = vdwg.mxu0
        %vm726 = vcmp.ge.f32.partialorder %v724, 0.0
        %v727 = vmul.f32 %v724, 0.01
        %v728 = vsel %vm726, %v724, %v727
        %s729 = scalar_lea.vmem %s7, 128
        %v730 = vld [vmem:[%s729] sm:$0xff]
        %v731 = vld [vmem:[%s729 + $0x8] sm:$0xff]
        %v732 = vld [vmem:[%s729 + $0x10] sm:$0xff]
        %v733 = vld [vmem:[%s729 + $0x18] sm:$0xff]
        %v734 = vld [vmem:[%s729 + $0x20] sm:$0xff]
        %v735 = vld [vmem:[%s729 + $0x28] sm:$0xff]
        %v736 = vld [vmem:[%s729 + $0x30] sm:$0xff]
        %v737 = vld [vmem:[%s729 + $0x38] sm:$0xff]
        %v738 = vld [vmem:[%s7] sm:$0xff]
        %v739 = vld [vmem:[%s7 + $0x8] sm:$0xff]
        %v740 = vld [vmem:[%s7 + $0x10] sm:$0xff]
        %v741 = vld [vmem:[%s7 + $0x18] sm:$0xff]
        %v742 = vld [vmem:[%s7 + $0x20] sm:$0xff]
        %v743 = vld [vmem:[%s7 + $0x28] sm:$0xff]
        %v744 = vld [vmem:[%s7 + $0x30] sm:$0xff]
        %v745 = vld [vmem:[%s7 + $0x38] sm:$0xff]
        %v747 = vsel %vm584, %v691, 0
        %749 = vmatpush.msra.mxu0 0.0
        %750 = vmatpush.msra.mxu0 0.0
        %751 = vmatpush.msra.mxu0 0.0
        %752 = vmatpush.msra.mxu0 0.0
        %753 = vmatpush.msra.mxu0 0.0
        %754 = vmatpush.msra.mxu0 0.0
        %755 = vmatpush.msra.mxu0 0.0
        %756 = vmatpush.msra.mxu0 0.0
        %757 = vmatpush.msra.mxu0 %v745
        %758 = vmatpush.msra.mxu0 %v744
        %759 = vmatpush.msra.mxu0 %v743
        %760 = vmatpush.msra.mxu0 %v742
        %761 = vmatpush.msra.mxu0 %v741
        %762 = vmatpush.msra.mxu0 %v740
        %763 = vmatpush.msra.mxu0 %v739
        %764 = vmatpush.msra.mxu0 %v738
        %765 = vmatmul.f32.gmra.mxu0 %v747
        %v766 = vpop.f32.mrf.mxu0
        %v767 = vadd.f32 0.0, %v766
        %768 = vdwg.mxu0
        %769 = vmatpush.msra.mxu0 0.0
        %770 = vmatpush.msra.mxu0 0.0
        %771 = vmatpush.msra.mxu0 0.0
        %772 = vmatpush.msra.mxu0 0.0
        %773 = vmatpush.msra.mxu0 0.0
        %774 = vmatpush.msra.mxu0 0.0
        %775 = vmatpush.msra.mxu0 0.0
        %776 = vmatpush.msra.mxu0 0.0
        %777 = vmatpush.msra.mxu0 %v737
        %778 = vmatpush.msra.mxu0 %v736
        %779 = vmatpush.msra.mxu0 %v735
        %780 = vmatpush.msra.mxu0 %v734
        %781 = vmatpush.msra.mxu0 %v733
        %782 = vmatpush.msra.mxu0 %v732
        %783 = vmatpush.msra.mxu0 %v731
        %784 = vmatpush.msra.mxu0 %v730
        %785 = vmatmul.f32.gmra.mxu0 %v704
        %v786 = vpop.f32.mrf.mxu0
        %v787 = vadd.f32 %v767, %v786
        %788 = vdwg.mxu0
        %v789 = vadd.f32 %v787, %v702
        %vm790 = vcmp.ge.f32.partialorder %v789, 0.0
        %v791 = vmul.f32 %v789, 0.01
        %v792 = vsel %vm790, %v789, %v791
        %v794 = vrot.slane %v792, 7
        %v797 = vrot.slane %v728, 7
        %v799 = vrot.slane %v792, 6
        %v801 = vrot.slane %v728, 6
        %v803 = vrot.slane %v792, 5
        %v805 = vrot.slane %v728, 5
        %v807 = vrot.slane %v792, 4
        %v809 = vsel %vm565, %v728, %v794
        %v810 = vsel %vm683, %v809, %v797
        %v811 = vsel %vm685, %v810, %v799
        %vm812 = vcmask 1043456
        %v813 = vsel %vm812, %v811, %v801
        %vm814 = vcmask 1044480
        %v815 = vsel %vm814, %v813, %v803
        %vm816 = vcmask 1045504
        %v817 = vsel %vm816, %v815, %v805
        %vm818 = vcmask 1046528
        %v819 = vsel %vm818, %v817, %v807
        %v820 = vld [vmem:[%s10] sm:$0x1]
        %v822 = vrot.slane %v819, 1
        %v824 = vsel %vm818, %v822, 0.0
        %s825 = scalar_lea.vmem %s9, 64
        %v826 = vld [vmem:[%s825] sm:$0xff]
        %v827 = vld [vmem:[%s825 + $0x8] sm:$0xff]
        %v828 = vld [vmem:[%s825 + $0x10] sm:$0xff]
        %v829 = vld [vmem:[%s825 + $0x18] sm:$0xff]
        %v830 = vld [vmem:[%s825 + $0x20] sm:$0xff]
        %v831 = vld [vmem:[%s825 + $0x28] sm:$0xff]
        %v832 = vld [vmem:[%s825 + $0x30] sm:$0xff]
        %v833 = vld [vmem:[%s825 + $0x38] sm:$0xff]
        %v835 = vperm.slane %v820, 0
        %v837 = vsel %vm584, %v819, 0
        %839 = vmatpush.msra.mxu0 0.0
        %840 = vmatpush.msra.mxu0 0.0
        %841 = vmatpush.msra.mxu0 0.0
        %842 = vmatpush.msra.mxu0 0.0
        %843 = vmatpush.msra.mxu0 0.0
        %844 = vmatpush.msra.mxu0 0.0
        %845 = vmatpush.msra.mxu0 0.0
        %846 = vmatpush.msra.mxu0 0.0
        %847 = vmatpush.msra.mxu0 %v833
        %848 = vmatpush.msra.mxu0 %v832
        %849 = vmatpush.msra.mxu0 %v831
        %850 = vmatpush.msra.mxu0 %v830
        %851 = vmatpush.msra.mxu0 %v829
        %852 = vmatpush.msra.mxu0 %v828
        %853 = vmatpush.msra.mxu0 %v827
        %854 = vmatpush.msra.mxu0 %v826
        %855 = vmatmul.f32.gmra.mxu0 %v837
        %v856 = vpop.f32.mrf.mxu0
        %v857 = vadd.f32 %v835, %v856
        %858 = vdwg.mxu0
        %vm859 = vcmp.ge.f32.partialorder %v857, 0.0
        %v860 = vmul.f32 %v857, 0.01
        %v861 = vsel %vm859, %v857, %v860
        %s862 = scalar_lea.vmem %s9, 128
        %v863 = vld [vmem:[%s862] sm:$0xff]
        %v864 = vld [vmem:[%s862 + $0x8] sm:$0xff]
        %v865 = vld [vmem:[%s862 + $0x10] sm:$0xff]
        %v866 = vld [vmem:[%s862 + $0x18] sm:$0xff]
        %v867 = vld [vmem:[%s862 + $0x20] sm:$0xff]
        %v868 = vld [vmem:[%s862 + $0x28] sm:$0xff]
        %v869 = vld [vmem:[%s862 + $0x30] sm:$0xff]
        %v870 = vld [vmem:[%s862 + $0x38] sm:$0xff]
        %v871 = vld [vmem:[%s9] sm:$0xff]
        %v872 = vld [vmem:[%s9 + $0x8] sm:$0xff]
        %v873 = vld [vmem:[%s9 + $0x10] sm:$0xff]
        %v874 = vld [vmem:[%s9 + $0x18] sm:$0xff]
        %v875 = vld [vmem:[%s9 + $0x20] sm:$0xff]
        %v876 = vld [vmem:[%s9 + $0x28] sm:$0xff]
        %v877 = vld [vmem:[%s9 + $0x30] sm:$0xff]
        %v878 = vld [vmem:[%s9 + $0x38] sm:$0xff]
        %v880 = vsel %vm584, %v824, 0
        %882 = vmatpush.msra.mxu0 0.0
        %883 = vmatpush.msra.mxu0 0.0
        %884 = vmatpush.msra.mxu0 0.0
        %885 = vmatpush.msra.mxu0 0.0
        %886 = vmatpush.msra.mxu0 0.0
        %887 = vmatpush.msra.mxu0 0.0
        %888 = vmatpush.msra.mxu0 0.0
        %889 = vmatpush.msra.mxu0 0.0
        %890 = vmatpush.msra.mxu0 %v878
        %891 = vmatpush.msra.mxu0 %v877
        %892 = vmatpush.msra.mxu0 %v876
        %893 = vmatpush.msra.mxu0 %v875
        %894 = vmatpush.msra.mxu0 %v874
        %895 = vmatpush.msra.mxu0 %v873
        %896 = vmatpush.msra.mxu0 %v872
        %897 = vmatpush.msra.mxu0 %v871
        %898 = vmatmul.f32.gmra.mxu0 %v880
        %v899 = vpop.f32.mrf.mxu0
        %v900 = vadd.f32 0.0, %v899
        %901 = vdwg.mxu0
        %902 = vmatpush.msra.mxu0 0.0
        %903 = vmatpush.msra.mxu0 0.0
        %904 = vmatpush.msra.mxu0 0.0
        %905 = vmatpush.msra.mxu0 0.0
        %906 = vmatpush.msra.mxu0 0.0
        %907 = vmatpush.msra.mxu0 0.0
        %908 = vmatpush.msra.mxu0 0.0
        %909 = vmatpush.msra.mxu0 0.0
        %910 = vmatpush.msra.mxu0 %v870
        %911 = vmatpush.msra.mxu0 %v869
        %912 = vmatpush.msra.mxu0 %v868
        %913 = vmatpush.msra.mxu0 %v867
        %914 = vmatpush.msra.mxu0 %v866
        %915 = vmatpush.msra.mxu0 %v865
        %916 = vmatpush.msra.mxu0 %v864
        %917 = vmatpush.msra.mxu0 %v863
        %918 = vmatmul.f32.gmra.mxu0 %v837
        %v919 = vpop.f32.mrf.mxu0
        %v920 = vadd.f32 %v900, %v919
        %921 = vdwg.mxu0
        %v922 = vadd.f32 %v920, %v835
        %vm923 = vcmp.ge.f32.partialorder %v922, 0.0
        %v924 = vmul.f32 %v922, 0.01
        %v925 = vsel %vm923, %v922, %v924
        %v927 = vrot.slane %v925, 7
        %v930 = vrot.slane %v861, 7
        %v932 = vrot.slane %v925, 6
        %v934 = vrot.slane %v861, 6
        %v936 = vrot.slane %v925, 5
        %v938 = vrot.slane %v861, 5
        %v940 = vrot.slane %v925, 4
        %v942 = vrot.slane %v861, 4
        %v944 = vrot.slane %v925, 3
        %v946 = vrot.slane %v861, 3
        %v948 = vrot.slane %v925, 2
        %v950 = vrot.slane %v861, 2
        %v952 = vrot.slane %v925, 1
        %v954 = vrot.slane %v861, 1
        %v956 = vsel %vm565, %v861, %v927
        %v957 = vsel %vm683, %v956, %v930
        %v958 = vsel %vm685, %v957, %v932
        %v959 = vsel %vm812, %v958, %v934
        %v960 = vsel %vm814, %v959, %v936
        %v961 = vsel %vm816, %v960, %v938
        %v962 = vsel %vm818, %v961, %v940
        %v963 = vsel %vm565, %v942, %v944
        %v964 = vsel %vm683, %v963, %v946
        %v965 = vsel %vm685, %v964, %v948
        %v966 = vsel %vm812, %v965, %v950
        %v967 = vsel %vm814, %v966, %v952
        %v968 = vsel %vm816, %v967, %v954
        %v969 = vsel %vm818, %v968, %v925
        %v972 = vrot.slane %v962, 7
        %v973 = vrot.slane %v969, 7
        %v974 = vsel %vm565, %v972, %v973
        %v977 = vsel %vm565, 0.0, %v972
        %v978 = vrot.slane %v962, 1
        %v979 = vrot.slane %v969, 1
        %v980 = vsel %vm818, %v978, %v979
        %v983 = vsel %vm818, %v979, 0.0
        %v984 = vld [vmem:[%s11] sm:$0xff]
        %v985 = vld [vmem:[%s11 + $0x8] sm:$0xff]
        %v986 = vld [vmem:[%s11 + $0x10] sm:$0xff]
        %v987 = vld [vmem:[%s11 + $0x18] sm:$0xff]
        %v988 = vld [vmem:[%s11 + $0x20] sm:$0xff]
        %v989 = vld [vmem:[%s11 + $0x28] sm:$0xff]
        %v990 = vld [vmem:[%s11 + $0x30] sm:$0xff]
        %v991 = vld [vmem:[%s11 + $0x38] sm:$0xff]
        %v992 = vld [vmem:[%s11 + $0x40] sm:$0xff]
        %v993 = vld [vmem:[%s11 + $0x48] sm:$0xff]
        %v994 = vld [vmem:[%s11 + $0x50] sm:$0xff]
        %v995 = vld [vmem:[%s11 + $0x58] sm:$0xff]
        %v996 = vld [vmem:[%s11 + $0x60] sm:$0xff]
        %v997 = vld [vmem:[%s11 + $0x68] sm:$0xff]
        %v998 = vld [vmem:[%s11 + $0x70] sm:$0xff]
        %v999 = vld [vmem:[%s11 + $0x78] sm:$0xff]
        %s1000 = scalar_lea.vmem %s11, 128
        %v1001 = vld [vmem:[%s1000] sm:$0xff]
        %v1002 = vld [vmem:[%s1000 + $0x8] sm:$0xff]
        %v1003 = vld [vmem:[%s1000 + $0x10] sm:$0xff]
        %v1004 = vld [vmem:[%s1000 + $0x18] sm:$0xff]
        %v1005 = vld [vmem:[%s1000 + $0x20] sm:$0xff]
        %v1006 = vld [vmem:[%s1000 + $0x28] sm:$0xff]
        %v1007 = vld [vmem:[%s1000 + $0x30] sm:$0xff]
        %v1008 = vld [vmem:[%s1000 + $0x38] sm:$0xff]
        %v1009 = vld [vmem:[%s1000 + $0x40] sm:$0xff]
        %v1010 = vld [vmem:[%s1000 + $0x48] sm:$0xff]
        %v1011 = vld [vmem:[%s1000 + $0x50] sm:$0xff]
        %v1012 = vld [vmem:[%s1000 + $0x58] sm:$0xff]
        %v1013 = vld [vmem:[%s1000 + $0x60] sm:$0xff]
        %v1014 = vld [vmem:[%s1000 + $0x68] sm:$0xff]
        %v1015 = vld [vmem:[%s1000 + $0x70] sm:$0xff]
        %v1016 = vld [vmem:[%s1000 + $0x78] sm:$0xff]
        %1017 = vmatpush.msra.mxu0 %v1016
        %1018 = vmatpush.msra.mxu0 %v1015
        %1019 = vmatpush.msra.mxu0 %v1014
        %1020 = vmatpush.msra.mxu0 %v1013
        %1021 = vmatpush.msra.mxu0 %v1012
        %1022 = vmatpush.msra.mxu0 %v1011
        %1023 = vmatpush.msra.mxu0 %v1010
        %1024 = vmatpush.msra.mxu0 %v1009
        %1025 = vmatpush.msra.mxu0 %v1008
        %1026 = vmatpush.msra.mxu0 %v1007
        %1027 = vmatpush.msra.mxu0 %v1006
        %1028 = vmatpush.msra.mxu0 %v1005
        %1029 = vmatpush.msra.mxu0 %v1004
        %1030 = vmatpush.msra.mxu0 %v1003
        %1031 = vmatpush.msra.mxu0 %v1002
        %1032 = vmatpush.msra.mxu0 %v1001
        %1033 = vmatmul.f32.gmra.mxu0 %v962
        %v1034 = vpop.f32.mrf.mxu0
        %v1035 = vadd.f32 0.0, %v1034
        %1036 = vmatmul.f32.gmra.mxu0 %v969
        %v1037 = vpop.f32.mrf.mxu0
        %v1038 = vadd.f32 0.0, %v1037
        %1039 = vdwg.mxu0
        %1040 = vmatpush.msra.mxu0 %v999
        %1041 = vmatpush.msra.mxu0 %v998
        %1042 = vmatpush.msra.mxu0 %v997
        %1043 = vmatpush.msra.mxu0 %v996
        %1044 = vmatpush.msra.mxu0 %v995
        %1045 = vmatpush.msra.mxu0 %v994
        %1046 = vmatpush.msra.mxu0 %v993
        %1047 = vmatpush.msra.mxu0 %v992
        %1048 = vmatpush.msra.mxu0 %v991
        %1049 = vmatpush.msra.mxu0 %v990
        %1050 = vmatpush.msra.mxu0 %v989
        %1051 = vmatpush.msra.mxu0 %v988
        %1052 = vmatpush.msra.mxu0 %v987
        %1053 = vmatpush.msra.mxu0 %v986
        %1054 = vmatpush.msra.mxu0 %v985
        %1055 = vmatpush.msra.mxu0 %v984
        %1056 = vmatmul.f32.gmra.mxu0 %v977
        %v1057 = vpop.f32.mrf.mxu0
        %v1058 = vadd.f32 %v1035, %v1057
        %1059 = vmatmul.f32.gmra.mxu0 %v974
        %v1060 = vpop.f32.mrf.mxu0
        %v1061 = vadd.f32 %v1038, %v1060
        %1062 = vdwg.mxu0
        %s1063 = scalar_lea.vmem %s11, 256
        %v1064 = vld [vmem:[%s1063] sm:$0xff]
        %v1065 = vld [vmem:[%s1063 + $0x8] sm:$0xff]
        %v1066 = vld [vmem:[%s1063 + $0x10] sm:$0xff]
        %v1067 = vld [vmem:[%s1063 + $0x18] sm:$0xff]
        %v1068 = vld [vmem:[%s1063 + $0x20] sm:$0xff]
        %v1069 = vld [vmem:[%s1063 + $0x28] sm:$0xff]
        %v1070 = vld [vmem:[%s1063 + $0x30] sm:$0xff]
        %v1071 = vld [vmem:[%s1063 + $0x38] sm:$0xff]
        %v1072 = vld [vmem:[%s1063 + $0x40] sm:$0xff]
        %v1073 = vld [vmem:[%s1063 + $0x48] sm:$0xff]
        %v1074 = vld [vmem:[%s1063 + $0x50] sm:$0xff]
        %v1075 = vld [vmem:[%s1063 + $0x58] sm:$0xff]
        %v1076 = vld [vmem:[%s1063 + $0x60] sm:$0xff]
        %v1077 = vld [vmem:[%s1063 + $0x68] sm:$0xff]
        %v1078 = vld [vmem:[%s1063 + $0x70] sm:$0xff]
        %v1079 = vld [vmem:[%s1063 + $0x78] sm:$0xff]
        %1080 = vmatpush.msra.mxu0 %v1079
        %1081 = vmatpush.msra.mxu0 %v1078
        %1082 = vmatpush.msra.mxu0 %v1077
        %1083 = vmatpush.msra.mxu0 %v1076
        %1084 = vmatpush.msra.mxu0 %v1075
        %1085 = vmatpush.msra.mxu0 %v1074
        %1086 = vmatpush.msra.mxu0 %v1073
        %1087 = vmatpush.msra.mxu0 %v1072
        %1088 = vmatpush.msra.mxu0 %v1071
        %1089 = vmatpush.msra.mxu0 %v1070
        %1090 = vmatpush.msra.mxu0 %v1069
        %1091 = vmatpush.msra.mxu0 %v1068
        %1092 = vmatpush.msra.mxu0 %v1067
        %1093 = vmatpush.msra.mxu0 %v1066
        %1094 = vmatpush.msra.mxu0 %v1065
        %1095 = vmatpush.msra.mxu0 %v1064
        %1096 = vmatmul.f32.gmra.mxu0 %v980
        %v1097 = vpop.f32.mrf.mxu0
        %v1098 = vadd.f32 0.0, %v1097
        %1099 = vmatmul.f32.gmra.mxu0 %v983
        %v1100 = vpop.f32.mrf.mxu0
        %v1101 = vadd.f32 0.0, %v1100
        %1102 = vdwg.mxu0
        %v1103 = vadd.f32 %v1058, %v1098
        %v1104 = vadd.f32 %v1061, %v1101
        %v1105 = vld [vmem:[#allocation8] sm:$0x1]
        %v1107 = vperm.slane %v1105, 0
        %v1109 = vadd.f32 %v1103, %v1107
        %v1110 = vadd.f32 %v1104, %v1107
        %v1111 = vtanh.pop %v1109
        %v1112 = vtanh.pop %v1110
        %1113 = vst.msk [vmem:[%s499] sm:$0xff] %vm536, %v1111
        %1114 = vst.msk [vmem:[%s499 + $0x8] sm:$0xff] %vm536, %v1112
        %1117 = vrot.lane.b32.xlu0 %v1111, 112
        %v1118 = vpop.permute.xlu0 %1117
        %1119 = vrot.lane.b32.xlu0 %v1112, 112
        %v1120 = vpop.permute.xlu0 %1119
        %s1123 = scalar_lea.vmem %s499, 16 [#allocation10]
        %1124 = vst.msk [vmem:[%s1123] sm:$0xff] %vm536, %v1118
        %1125 = vst.msk [vmem:[%s1123 + $0x8] sm:$0xff] %vm536, %v1120
        %1126 = vrot.lane.b32.xlu0 %v1111, 96
        %v1127 = vpop.permute.xlu0 %1126
        %1128 = vrot.lane.b32.xlu0 %v1112, 96
        %v1129 = vpop.permute.xlu0 %1128
        %s1132 = scalar_lea.vmem %s499, 32 [#allocation10]
        %1133 = vst.msk [vmem:[%s1132] sm:$0xff] %vm536, %v1127
        %1134 = vst.msk [vmem:[%s1132 + $0x8] sm:$0xff] %vm536, %v1129
        %s1135 = sand.u32 %s318, 1
        %s1136 = scalar_lea.sflag [#allocation4], %s1135
        %s1137 = sand.u32 %s318, 1
        %s1138 = smul.addr %s1137, 48
        %s1139 = scalar_lea.vmem [#allocation10], %s1138
        // Predicated region
        $region89: #{decoder_forward.1} parent=71 // pred_check
          %p1140 = pneg %p328
        $region90: #{decoder_forward.1} parent=71 // pred_check_branch
          %1142 = sbr.rel (%p1140) target = $region92
        $region91: #{decoder_forward.1} parent=71 // pred_region
          %1144 = vsyncadd %s1136, 0
          %s1145 = smul.addr %s32, 6
          %s1146 = smul.addr %s1145, 8
          %s1147 = scalar_lea.hbm %s13, %s1146
          %s1148 = sshll.u32 %s1139, 4
          %s1149 = int_to_ptr.vmem [resolvable:$true] %s1148
          %s1150 = sshll.u32 %s1147, 4
          %s1151 = int_to_ptr.hbm [resolvable:$true] %s1150
          %1156 = dma.vmem_to_hbm [thread:$0]  %s1149, 768, %s1151, %s1136, 128, 128, 8
        $region92: #{decoder_forward.1} parent=71 // pred_fallthru
          _
      $region72: #{decoder_forward.1} parent=5 // pred_fallthru
        _
      %p1157 = scmp.le.s32.totalorder 2, %s27
      // Predicated region
      $region93: #{decoder_forward.1} parent=5 // pred_check
        %p1158 = pneg %p1157
      $region94: #{decoder_forward.1} parent=5 // pred_check_branch
        %1160 = sbr.rel (%p1158) target = $region96
      $region95: #{decoder_forward.1} parent=5 // pred_region
        %s1161 = ssub.s32 %s27, 2
        // Predicated region
        $region97: #{decoder_forward.1} parent=95 // pred_check
          %p1162 = pneg %p334
        $region98: #{decoder_forward.1} parent=95 // pred_check_branch
          %1164 = sbr.rel (%p1162) target = $region100
        $region99: #{decoder_forward.1} parent=95 // pred_region
          %s1165 = sand.u32 %s319, 1
          %s1166 = scalar_lea.sflag [#allocation4], %s1165
          %s1167 = sand.u32 %s319, 1
          %s1168 = smul.addr %s1167, 48
          %s1169 = scalar_lea.vmem [#allocation10], %s1168
          %1171 = dma.done %s1166, 768
        $region100: #{decoder_forward.1} parent=95 // pred_fallthru
          _
      $region96: #{decoder_forward.1} parent=5 // pred_fallthru
        _
    $region6: #{decoder_forward.1} parent=1 // loop_footer
      %s31 = sadd.s32 1, %s27
    $region7: #{decoder_forward.1} parent=1 // loop_footer_branch
      %26 = sbr.rel target = $region3
    $region8: #{decoder_forward.1} parent=1 // loop_exit
      _
    %1172 = vsyncpa [#allocation3], 1
    %s1173 = scalar_lea.sflag [#allocation3], 1
    %1174 = vsyncpa %s1173, 1
    %1175 = vsyncpa [#allocation6], 1
    %1176 = vsyncpa [#allocation9], 1
    %1177 = vsyncpa [#allocation4], 1
    %s1178 = scalar_lea.sflag [#allocation4], 1
    %1179 = vsyncpa %s1178, 1

</llo_original>
